<compile_context>
chip_gen: v6e
topology: v6e:2x2x1
jax: 0.10.0
libtpu: 0.0.40
codegen_flags: <defaults>
</compile_context>

<pallas_src>
import jax
import jax.numpy as jnp
from jax.experimental import pallas as pl
from jax.experimental.pallas import tpu as pltpu


# ----------------------------------------------------------------------------
# Fused kernel factory.
# ----------------------------------------------------------------------------
def _make_fused_rnn_kernel(n_layers, seq_len, batch_p, hidden, emb_dim):
    S, Bp, H, E = seq_len, batch_p, hidden, emb_dim
    H2, H4, H6, H8 = 2 * H, 4 * H, 6 * H, 8 * H

    def kernel(*refs):
        x_ref, msk_ref = refs[0], refs[1]
        slab_refs = refs[2:2 + n_layers]
        fc_ref = refs[2 + n_layers]
        out_ref = refs[3 + n_layers]
        seq_ref = refs[4 + n_layers]          # VMEM scratch: (S*Bp, 4H)

        # Boolean validity mask, computed once (not per step):
        #   row-group t, cols [0:H]  -> forward direction, time t
        #   row-group t, cols [H:2H] -> backward direction, time S-1-t
        mvalid = msk_ref[...] > 0.5           # (S*Bp, 2H) bool

        def run_layer(layer, x_bf16):
            din = 2 * E if layer == 0 else H4
            slab = slab_refs[layer]
            # Hoisted loads + bf16 casts (off the recurrent critical path).
            wih = slab[0:din, :].astype(jnp.bfloat16)           # (din, 8H)
            whh = slab[din:din + H2, :].astype(jnp.bfloat16)    # (2H, 8H)
            bias = slab[din + H2:din + H2 + 1, :]               # (1, 8H) f32

            # Whole-sequence input projection for BOTH directions in one MXU
            # call; the fwd/bwd time-direction select is already baked into
            # the input layout + block-structured W_ih.
            gx = jnp.dot(x_bf16, wih,
                         preferred_element_type=jnp.float32) + bias  # (S*Bp,8H)

            h = jnp.zeros((Bp, H2), jnp.float32)   # [h_fwd | h_bwd]
            c = jnp.zeros((Bp, H2), jnp.float32)
            need_seq = layer < n_layers - 1

            # TODO(synk): latch W_hh in the MXU across the unrolled steps via
            # pltpu.matmul_push_rhs / matmul_acc_lhs / matmul_pop to avoid
            # re-pushing the RHS every step; kept as jnp.dot for portable
            # lowering across v5e/v6e/v7x.
            for t in range(S):                 # static, fully unrolled
                gates = gx[t * Bp:(t + 1) * Bp, :] + jnp.dot(
                    h.astype(jnp.bfloat16), whh,
                    preferred_element_type=jnp.float32)          # (Bp, 8H)

                # Gate layout: [i | f | o | g], each 2H wide [fwd | bwd].
                sig = jax.nn.sigmoid(gates[:, 0:H6])             # i, f, o
                g_g = jnp.tanh(gates[:, H6:H8])
                i_g = sig[:, 0:H2]
                f_g = sig[:, H2:H4]
                o_g = sig[:, H4:H6]

                c_new = f_g * c + i_g * g_g
                h_new = o_g * jnp.tanh(c_new)

                # pack_padded_sequence: freeze state at padded (t, b) slots.
                m = mvalid[t * Bp:(t + 1) * Bp, :]               # (Bp, 2H) bool
                h = jnp.where(m, h_new, h)
                c = jnp.where(m, c_new, c)

                if need_seq:
                    # pad_packed_sequence(padding_value=0): zero padded steps.
                    hm = jnp.where(m, h_new, 0.0)                # (Bp, 2H)
                    tb = S - 1 - t
                    # Scratch row-group u layout (dual time order so the next
                    # layer needs NO select / reversal):
                    #   [hf(u) | hb(S-1-u) | hf(S-1-u) | hb(u)]
                    seq_ref[t * Bp:(t + 1) * Bp, 0:H2] = hm
                    seq_ref[tb * Bp:(tb + 1) * Bp, H2:H4] = hm
            return h

        h_fin = run_layer(0, x_ref[...].astype(jnp.bfloat16))
        for layer in range(1, n_layers):
            # Inter-layer dropout: eval-mode identity.
            h_fin = run_layer(layer, seq_ref[...].astype(jnp.bfloat16))

        # hidden = cat(hidden[-2], hidden[-1]) == [h_fwd_final | h_bwd_final]
        fcw = fc_ref[0:H2, :]                   # (2H, OUT_PAD) f32
        fcb = fc_ref[H2:H2 + 1, :]              # (1, OUT_PAD)  f32
        out_ref[...] = jnp.dot(h_fin, fcw,
                               preferred_element_type=jnp.float32) + fcb

    return kernel


# ----------------------------------------------------------------------------
# Forward pass (mirrors RNN.forward, inference mode).
# ----------------------------------------------------------------------------
def rnn_forward(params, text, text_lengths):
    S, B = text.shape
    slabs = params["layer_slabs"]            # list of (din + 2H + 1, 8H) f32
    n_layers = len(slabs)
    fc_w, fc_b = params["fc_w"], params["fc_b"]
    H = fc_w.shape[0] // 2
    E = params["embedding"].shape[1]
    out_dim = fc_w.shape[1]

    Bp = max(8, ((B + 7) // 8) * 8)           # sublane-full batch

    # Embedding lookup (data-dependent gather) is plain-JAX glue; padding_idx
    # row is zero.  self.dropout(embedded): eval-mode identity.
    emb = params["embedding"][text]                           # (S, B, E)
    emb = jnp.pad(emb, ((0, 0), (0, Bp - B), (0, 0)))         # (S, Bp, E)
    # Layer-0 input: [emb(t) | emb(S-1-t)] so fwd/bwd share one projection.
    x_cat = jnp.concatenate([emb, emb[::-1]], axis=-1)        # (S, Bp, 2E)
    x_flat = x_cat.reshape(S * Bp, 2 * E)

    # Per-(t, b) validity: fwd uses time t, bwd (at loop step t) uses S-1-t.
    lengths = jnp.pad(text_lengths.astype(jnp.int32), (0, Bp - B))
    t_idx = jnp.arange(S, dtype=jnp.int32)[:, None]
    vf = (t_idx < lengths[None, :]).astype(jnp.float32)           # (S, Bp)
    vb = ((S - 1 - t_idx) < lengths[None, :]).astype(jnp.float32)  # (S, Bp)
    msk = jnp.concatenate(
        [jnp.broadcast_to(vf[:, :, None], (S, Bp, H)),
         jnp.broadcast_to(vb[:, :, None], (S, Bp, H))],
        axis=-1).reshape(S * Bp, 2 * H)

    # FC slab: rows [0:2H] = W (zero-padded to 128 output lanes for a dense
    # (8,128) output store), row 2H = bias.
    OUT_PAD = ((out_dim + 127) // 128) * 128
    fc_slab = jnp.zeros((2 * H + 1, OUT_PAD), jnp.float32)
    fc_slab = fc_slab.at[0:2 * H, 0:out_dim].set(fc_w)
    fc_slab = fc_slab.at[2 * H, 0:out_dim].set(fc_b)

    kernel = _make_fused_rnn_kernel(n_layers, S, Bp, H, E)
    vmem = pl.BlockSpec(memory_space=pltpu.MemorySpace.VMEM)
    n_in = 2 + n_layers + 1

    out = pl.pallas_call(
        kernel,
        out_shape=jax.ShapeDtypeStruct((Bp, OUT_PAD), jnp.float32),
        in_specs=[vmem] * n_in,
        out_specs=vmem,
        scratch_shapes=[pltpu.VMEM((S * Bp, 4 * H), jnp.float32)],
    )(x_flat, msk, *slabs, fc_slab)

    return out[:B, :out_dim]


# ----------------------------------------------------------------------------
# Parameter construction: per-direction PyTorch-layout weights fused into the
# kernel's combined layout and packed into one slab per layer.
# ----------------------------------------------------------------------------
def _fuse_bidir_layer(wih_f, whh_f, bias_f, wih_b, whh_b, bias_b, H, layer0):
    """Fused gate-column layout: blocks [i | f | o | g], each 2H wide with the
    forward half first.  W_hh is block-diagonal (fwd rows -> fwd cols).  For
    layer 0 the input rows are [emb_fwd(E) ; emb_bwd(E)]; for layers >= 1 the
    input rows match the scratch layout [hf(u) | hb(S-1-u) | hf(S-1-u) | hb(u)].
    Returns slab = [W_ih ; W_hh ; bias] of shape (din + 2H + 1, 8H)."""
    dest = {0: 0, 1: 1, 2: 3, 3: 2}     # src gate (i,f,g,o) -> dest block
    H8 = 8 * H
    if layer0:
        ein = wih_f.shape[0]            # E
        din = 2 * ein
    else:
        din = 4 * H                     # wih_f is (2H, 4H)
    wih = jnp.zeros((din, H8), jnp.float32)
    whh = jnp.zeros((2 * H, H8), jnp.float32)
    bias = jnp.zeros((1, H8), jnp.float32)
    for k in range(4):
        d = dest[k]
        cf = slice(d * 2 * H, d * 2 * H + H)           # fwd dest cols
        cb = slice(d * 2 * H + H, (d + 1) * 2 * H)     # bwd dest cols
        sf = slice(k * H, (k + 1) * H)                 # src cols (gate k)
        if layer0:
            wih = wih.at[0:ein, cf].set(wih_f[:, sf])
            wih = wih.at[ein:2 * ein, cb].set(wih_b[:, sf])
        else:
            wih = wih.at[0:H, cf].set(wih_f[0:H, sf])          # hf(u)     -> fwd
            wih = wih.at[3 * H:4 * H, cf].set(wih_f[H:2 * H, sf])  # hb(u) -> fwd
            wih = wih.at[2 * H:3 * H, cb].set(wih_b[0:H, sf])      # hf(S-1-u)->bwd
            wih = wih.at[H:2 * H, cb].set(wih_b[H:2 * H, sf])      # hb(S-1-u)->bwd
        whh = whh.at[0:H, cf].set(whh_f[:, sf])
        whh = whh.at[H:2 * H, cb].set(whh_b[:, sf])
        bias = bias.at[0, cf].set(bias_f[sf])
        bias = bias.at[0, cb].set(bias_b[sf])
    return jnp.concatenate([wih, whh, bias], axis=0)


def init_params(key, input_dim, embedding_dim, hidden_dim, output_dim,
                n_layers, bidirectional, pad_idx):
    assert bidirectional, "this script instantiates the bidirectional path"
    keys = iter(jax.random.split(key, 8 * n_layers + 8))

    emb = jax.random.normal(next(keys), (input_dim, embedding_dim), jnp.float32)
    emb = emb.at[pad_idx].set(0.0)

    k = 1.0 / jnp.sqrt(hidden_dim)
    layer_slabs = []
    in_dim = embedding_dim
    for layer in range(n_layers):
        per_dir = []
        for _d in range(2):  # forward, backward
            w_ih = jax.random.uniform(next(keys), (in_dim, 4 * hidden_dim),
                                      jnp.float32, -k, k)
            w_hh = jax.random.uniform(next(keys), (hidden_dim, 4 * hidden_dim),
                                      jnp.float32, -k, k)
            b_ih = jax.random.uniform(next(keys), (4 * hidden_dim,),
                                      jnp.float32, -k, k)
            b_hh = jax.random.uniform(next(keys), (4 * hidden_dim,),
                                      jnp.float32, -k, k)
            per_dir.append((w_ih, w_hh, b_ih + b_hh))
        (wf, hf, bf), (wb, hb, bb) = per_dir
        layer_slabs.append(
            _fuse_bidir_layer(wf, hf, bf, wb, hb, bb, hidden_dim,
                              layer0=(layer == 0)))
        in_dim = 2 * hidden_dim

    fc_in = 2 * hidden_dim
    kf = 1.0 / jnp.sqrt(fc_in)
    fc_w = jax.random.uniform(next(keys), (fc_in, output_dim),
                              jnp.float32, -kf, kf)
    fc_b = jax.random.uniform(next(keys), (output_dim,), jnp.float32, -kf, kf)

    return {"embedding": emb, "layer_slabs": layer_slabs,
            "fc_w": fc_w, "fc_b": fc_b}


if __name__ == "__main__":
    # Hyperparameters consistent with the module's __init__.
    INPUT_DIM = 50       # vocab size
    EMBEDDING_DIM = 32
    HIDDEN_DIM = 32
    OUTPUT_DIM = 4       # number of emotion classes
    N_LAYERS = 2
    BIDIRECTIONAL = True
    PAD_IDX = 0
    SEQ_LEN = 8
    BATCH = 2

    key = jax.random.PRNGKey(0)
    pkey, tkey = jax.random.split(key)

    params = init_params(pkey, INPUT_DIM, EMBEDDING_DIM, HIDDEN_DIM,
                         OUTPUT_DIM, N_LAYERS, BIDIRECTIONAL, PAD_IDX)

    # text: (seq_len, batch) int32, padded with PAD_IDX beyond each length.
    text = jax.random.randint(tkey, (SEQ_LEN, BATCH), 1, INPUT_DIM, jnp.int32)
    text_lengths = jnp.array([8, 5], dtype=jnp.int32)   # sorted descending
    time_idx = jnp.arange(SEQ_LEN, dtype=jnp.int32)[:, None]
    text = jnp.where(time_idx < text_lengths[None, :], text, PAD_IDX)

    logits = jax.jit(rnn_forward)(params, text, text_lengths)
    jax.block_until_ready(logits)
    assert logits.shape == (BATCH, OUTPUT_DIM)
    assert bool(jnp.all(jnp.isfinite(logits)))
    print("KERNEL_OK")
</pallas_src>

<mosaic_0001>
module attributes {stable_mosaic.version = 11 : i64} {
  func.func @kernel(%arg0: memref<64x64xf32, #tpu.memory_space<vmem>>, %arg1: memref<64x64xf32, #tpu.memory_space<vmem>>, %arg2: memref<129x256xf32, #tpu.memory_space<vmem>>, %arg3: memref<193x256xf32, #tpu.memory_space<vmem>>, %arg4: memref<65x128xf32, #tpu.memory_space<vmem>>, %arg5: memref<8x128xf32, #tpu.memory_space<vmem>>, %arg6: memref<64x128xf32, #tpu.memory_space<vmem>>) attributes {dimension_semantics = [], scalar_prefetch = 0 : i64, scratch_operands = 1 : i64, tpu.core_type = #tpu.core_type<tc>} {
    %c0 = arith.constant 0 : index
    %c0_0 = arith.constant 0 : index
    %0 = vector.load %arg1[%c0, %c0_0] : memref<64x64xf32, #tpu.memory_space<vmem>>, vector<64x64xf32>
    %cst = arith.constant 5.000000e-01 : f32
    %1 = vector.broadcast %cst : f32 to vector<64x64xf32>
    %2 = arith.cmpf ogt, %0, %1 : vector<64x64xf32>
    %c0_1 = arith.constant 0 : index
    %c0_2 = arith.constant 0 : index
    %3 = vector.load %arg0[%c0_1, %c0_2] : memref<64x64xf32, #tpu.memory_space<vmem>>, vector<64x64xf32>
    %4 = arith.truncf %3 : vector<64x64xf32> to vector<64x64xbf16>
    %c0_3 = arith.constant 0 : index
    %c0_4 = arith.constant 0 : index
    %5 = vector.load %arg2[%c0_3, %c0_4] : memref<129x256xf32, #tpu.memory_space<vmem>>, vector<64x256xf32>
    %6 = arith.truncf %5 : vector<64x256xf32> to vector<64x256xbf16>
    %c64 = arith.constant 64 : index
    %c0_5 = arith.constant 0 : index
    %7 = vector.load %arg2[%c64, %c0_5] : memref<129x256xf32, #tpu.memory_space<vmem>>, vector<64x256xf32>
    %8 = arith.truncf %7 : vector<64x256xf32> to vector<64x256xbf16>
    %c128 = arith.constant 128 : index
    %c0_6 = arith.constant 0 : index
    %9 = vector.load %arg2[%c128, %c0_6] : memref<129x256xf32, #tpu.memory_space<vmem>>, vector<1x256xf32>
    %cst_7 = arith.constant dense<0.000000e+00> : vector<64x256xf32>
    %10 = tpu.matmul %4, %6, %cst_7 {dimension_numbers = #tpu.dot_dimension_numbers<[1], [0], [0], [1], [0, 0, 1, 1], [], []>} : vector<64x64xbf16>, vector<64x256xbf16>, vector<64x256xf32> -> vector<64x256xf32>
    %11 = vector.broadcast %9 : vector<1x256xf32> to vector<64x256xf32>
    %12 = arith.addf %10, %11 : vector<64x256xf32>
    %cst_8 = arith.constant 0.000000e+00 : f32
    %13 = vector.broadcast %cst_8 : f32 to vector<8x64xf32>
    %cst_9 = arith.constant 0.000000e+00 : f32
    %14 = vector.broadcast %cst_9 : f32 to vector<8x64xf32>
    %15 = vector.extract_strided_slice %12 {offsets = [0, 0], sizes = [8, 256], strides = [1, 1]} : vector<64x256xf32> to vector<8x256xf32>
    %16 = arith.truncf %13 : vector<8x64xf32> to vector<8x64xbf16>
    %cst_10 = arith.constant dense<0.000000e+00> : vector<8x256xf32>
    %17 = tpu.matmul %16, %8, %cst_10 {dimension_numbers = #tpu.dot_dimension_numbers<[1], [0], [0], [1], [0, 0, 1, 1], [], []>} : vector<8x64xbf16>, vector<64x256xbf16>, vector<8x256xf32> -> vector<8x256xf32>
    %18 = arith.addf %15, %17 : vector<8x256xf32>
    %19 = vector.extract_strided_slice %18 {offsets = [0, 0], sizes = [8, 192], strides = [1, 1]} : vector<8x256xf32> to vector<8x192xf32>
    %20 = arith.negf %19 : vector<8x192xf32>
    %21 = math.exp %20 : vector<8x192xf32>
    %cst_11 = arith.constant 1.000000e+00 : f32
    %22 = vector.broadcast %cst_11 : f32 to vector<8x192xf32>
    %23 = arith.addf %22, %21 : vector<8x192xf32>
    %24 = arith.divf %22, %23 : vector<8x192xf32>
    %25 = vector.extract_strided_slice %18 {offsets = [0, 192], sizes = [8, 64], strides = [1, 1]} : vector<8x256xf32> to vector<8x64xf32>
    %26 = math.tanh %25 : vector<8x64xf32>
    %27 = vector.extract_strided_slice %24 {offsets = [0, 0], sizes = [8, 64], strides = [1, 1]} : vector<8x192xf32> to vector<8x64xf32>
    %28 = vector.extract_strided_slice %24 {offsets = [0, 64], sizes = [8, 64], strides = [1, 1]} : vector<8x192xf32> to vector<8x64xf32>
    %29 = vector.extract_strided_slice %24 {offsets = [0, 128], sizes = [8, 64], strides = [1, 1]} : vector<8x192xf32> to vector<8x64xf32>
    %30 = arith.mulf %28, %14 : vector<8x64xf32>
    %31 = arith.mulf %27, %26 : vector<8x64xf32>
    %32 = arith.addf %30, %31 : vector<8x64xf32>
    %33 = math.tanh %32 : vector<8x64xf32>
    %34 = arith.mulf %29, %33 : vector<8x64xf32>
    %35 = vector.extract_strided_slice %2 {offsets = [0, 0], sizes = [8, 64], strides = [1, 1]} : vector<64x64xi1> to vector<8x64xi1>
    %36 = arith.select %35, %34, %13 : vector<8x64xi1>, vector<8x64xf32>
    %37 = arith.select %35, %32, %14 : vector<8x64xi1>, vector<8x64xf32>
    %cst_12 = arith.constant 0.000000e+00 : f32
    %38 = vector.broadcast %cst_12 : f32 to vector<8x64xf32>
    %39 = arith.select %35, %34, %38 : vector<8x64xi1>, vector<8x64xf32>
    %c0_13 = arith.constant 0 : index
    %c0_14 = arith.constant 0 : index
    %40 = vector.load %arg6[%c0_13, %c0_14] : memref<64x128xf32, #tpu.memory_space<vmem>>, vector<8x64xf32>
    tpu.vector_store %arg6[%c0_13, %c0_14], %39 {strides = array<i32>} : memref<64x128xf32, #tpu.memory_space<vmem>>, vector<8x64xf32>,
    %c56 = arith.constant 56 : index
    %c64_15 = arith.constant 64 : index
    %41 = vector.load %arg6[%c56, %c64_15] : memref<64x128xf32, #tpu.memory_space<vmem>>, vector<8x64xf32>
    tpu.vector_store %arg6[%c56, %c64_15], %39 {strides = array<i32>} : memref<64x128xf32, #tpu.memory_space<vmem>>, vector<8x64xf32>,
    %42 = vector.extract_strided_slice %12 {offsets = [8, 0], sizes = [8, 256], strides = [1, 1]} : vector<64x256xf32> to vector<8x256xf32>
    %43 = arith.truncf %36 : vector<8x64xf32> to vector<8x64xbf16>
    %cst_16 = arith.constant dense<0.000000e+00> : vector<8x256xf32>
    %44 = tpu.matmul %43, %8, %cst_16 {dimension_numbers = #tpu.dot_dimension_numbers<[1], [0], [0], [1], [0, 0, 1, 1], [], []>} : vector<8x64xbf16>, vector<64x256xbf16>, vector<8x256xf32> -> vector<8x256xf32>
    %45 = arith.addf %42, %44 : vector<8x256xf32>
    %46 = vector.extract_strided_slice %45 {offsets = [0, 0], sizes = [8, 192], strides = [1, 1]} : vector<8x256xf32> to vector<8x192xf32>
    %47 = arith.negf %46 : vector<8x192xf32>
    %48 = math.exp %47 : vector<8x192xf32>
    %cst_17 = arith.constant 1.000000e+00 : f32
    %49 = vector.broadcast %cst_17 : f32 to vector<8x192xf32>
    %50 = arith.addf %49, %48 : vector<8x192xf32>
    %51 = arith.divf %49, %50 : vector<8x192xf32>
    %52 = vector.extract_strided_slice %45 {offsets = [0, 192], sizes = [8, 64], strides = [1, 1]} : vector<8x256xf32> to vector<8x64xf32>
    %53 = math.tanh %52 : vector<8x64xf32>
    %54 = vector.extract_strided_slice %51 {offsets = [0, 0], sizes = [8, 64], strides = [1, 1]} : vector<8x192xf32> to vector<8x64xf32>
    %55 = vector.extract_strided_slice %51 {offsets = [0, 64], sizes = [8, 64], strides = [1, 1]} : vector<8x192xf32> to vector<8x64xf32>
    %56 = vector.extract_strided_slice %51 {offsets = [0, 128], sizes = [8, 64], strides = [1, 1]} : vector<8x192xf32> to vector<8x64xf32>
    %57 = arith.mulf %55, %37 : vector<8x64xf32>
    %58 = arith.mulf %54, %53 : vector<8x64xf32>
    %59 = arith.addf %57, %58 : vector<8x64xf32>
    %60 = math.tanh %59 : vector<8x64xf32>
    %61 = arith.mulf %56, %60 : vector<8x64xf32>
    %62 = vector.extract_strided_slice %2 {offsets = [8, 0], sizes = [8, 64], strides = [1, 1]} : vector<64x64xi1> to vector<8x64xi1>
    %63 = arith.select %62, %61, %36 : vector<8x64xi1>, vector<8x64xf32>
    %64 = arith.select %62, %59, %37 : vector<8x64xi1>, vector<8x64xf32>
    %cst_18 = arith.constant 0.000000e+00 : f32
    %65 = vector.broadcast %cst_18 : f32 to vector<8x64xf32>
    %66 = arith.select %62, %61, %65 : vector<8x64xi1>, vector<8x64xf32>
    %c8 = arith.constant 8 : index
    %c0_19 = arith.constant 0 : index
    %67 = vector.load %arg6[%c8, %c0_19] : memref<64x128xf32, #tpu.memory_space<vmem>>, vector<8x64xf32>
    tpu.vector_store %arg6[%c8, %c0_19], %66 {strides = array<i32>} : memref<64x128xf32, #tpu.memory_space<vmem>>, vector<8x64xf32>,
    %c48 = arith.constant 48 : index
    %c64_20 = arith.constant 64 : index
    %68 = vector.load %arg6[%c48, %c64_20] : memref<64x128xf32, #tpu.memory_space<vmem>>, vector<8x64xf32>
    tpu.vector_store %arg6[%c48, %c64_20], %66 {strides = array<i32>} : memref<64x128xf32, #tpu.memory_space<vmem>>, vector<8x64xf32>,
    %69 = vector.extract_strided_slice %12 {offsets = [16, 0], sizes = [8, 256], strides = [1, 1]} : vector<64x256xf32> to vector<8x256xf32>
    %70 = arith.truncf %63 : vector<8x64xf32> to vector<8x64xbf16>
    %cst_21 = arith.constant dense<0.000000e+00> : vector<8x256xf32>
    %71 = tpu.matmul %70, %8, %cst_21 {dimension_numbers = #tpu.dot_dimension_numbers<[1], [0], [0], [1], [0, 0, 1, 1], [], []>} : vector<8x64xbf16>, vector<64x256xbf16>, vector<8x256xf32> -> vector<8x256xf32>
    %72 = arith.addf %69, %71 : vector<8x256xf32>
    %73 = vector.extract_strided_slice %72 {offsets = [0, 0], sizes = [8, 192], strides = [1, 1]} : vector<8x256xf32> to vector<8x192xf32>
    %74 = arith.negf %73 : vector<8x192xf32>
    %75 = math.exp %74 : vector<8x192xf32>
    %cst_22 = arith.constant 1.000000e+00 : f32
    %76 = vector.broadcast %cst_22 : f32 to vector<8x192xf32>
    %77 = arith.addf %76, %75 : vector<8x192xf32>
    %78 = arith.divf %76, %77 : vector<8x192xf32>
    %79 = vector.extract_strided_slice %72 {offsets = [0, 192], sizes = [8, 64], strides = [1, 1]} : vector<8x256xf32> to vector<8x64xf32>
    %80 = math.tanh %79 : vector<8x64xf32>
    %81 = vector.extract_strided_slice %78 {offsets = [0, 0], sizes = [8, 64], strides = [1, 1]} : vector<8x192xf32> to vector<8x64xf32>
    %82 = vector.extract_strided_slice %78 {offsets = [0, 64], sizes = [8, 64], strides = [1, 1]} : vector<8x192xf32> to vector<8x64xf32>
    %83 = vector.extract_strided_slice %78 {offsets = [0, 128], sizes = [8, 64], strides = [1, 1]} : vector<8x192xf32> to vector<8x64xf32>
    %84 = arith.mulf %82, %64 : vector<8x64xf32>
    %85 = arith.mulf %81, %80 : vector<8x64xf32>
    %86 = arith.addf %84, %85 : vector<8x64xf32>
    %87 = math.tanh %86 : vector<8x64xf32>
    %88 = arith.mulf %83, %87 : vector<8x64xf32>
    %89 = vector.extract_strided_slice %2 {offsets = [16, 0], sizes = [8, 64], strides = [1, 1]} : vector<64x64xi1> to vector<8x64xi1>
    %90 = arith.select %89, %88, %63 : vector<8x64xi1>, vector<8x64xf32>
    %91 = arith.select %89, %86, %64 : vector<8x64xi1>, vector<8x64xf32>
    %cst_23 = arith.constant 0.000000e+00 : f32
    %92 = vector.broadcast %cst_23 : f32 to vector<8x64xf32>
    %93 = arith.select %89, %88, %92 : vector<8x64xi1>, vector<8x64xf32>
    %c16 = arith.constant 16 : index
    %c0_24 = arith.constant 0 : index
    %94 = vector.load %arg6[%c16, %c0_24] : memref<64x128xf32, #tpu.memory_space<vmem>>, vector<8x64xf32>
    tpu.vector_store %arg6[%c16, %c0_24], %93 {strides = array<i32>} : memref<64x128xf32, #tpu.memory_space<vmem>>, vector<8x64xf32>,
    %c40 = arith.constant 40 : index
    %c64_25 = arith.constant 64 : index
    %95 = vector.load %arg6[%c40, %c64_25] : memref<64x128xf32, #tpu.memory_space<vmem>>, vector<8x64xf32>
    tpu.vector_store %arg6[%c40, %c64_25], %93 {strides = array<i32>} : memref<64x128xf32, #tpu.memory_space<vmem>>, vector<8x64xf32>,
    %96 = vector.extract_strided_slice %12 {offsets = [24, 0], sizes = [8, 256], strides = [1, 1]} : vector<64x256xf32> to vector<8x256xf32>
    %97 = arith.truncf %90 : vector<8x64xf32> to vector<8x64xbf16>
    %cst_26 = arith.constant dense<0.000000e+00> : vector<8x256xf32>
    %98 = tpu.matmul %97, %8, %cst_26 {dimension_numbers = #tpu.dot_dimension_numbers<[1], [0], [0], [1], [0, 0, 1, 1], [], []>} : vector<8x64xbf16>, vector<64x256xbf16>, vector<8x256xf32> -> vector<8x256xf32>
    %99 = arith.addf %96, %98 : vector<8x256xf32>
    %100 = vector.extract_strided_slice %99 {offsets = [0, 0], sizes = [8, 192], strides = [1, 1]} : vector<8x256xf32> to vector<8x192xf32>
    %101 = arith.negf %100 : vector<8x192xf32>
    %102 = math.exp %101 : vector<8x192xf32>
    %cst_27 = arith.constant 1.000000e+00 : f32
    %103 = vector.broadcast %cst_27 : f32 to vector<8x192xf32>
    %104 = arith.addf %103, %102 : vector<8x192xf32>
    %105 = arith.divf %103, %104 : vector<8x192xf32>
    %106 = vector.extract_strided_slice %99 {offsets = [0, 192], sizes = [8, 64], strides = [1, 1]} : vector<8x256xf32> to vector<8x64xf32>
    %107 = math.tanh %106 : vector<8x64xf32>
    %108 = vector.extract_strided_slice %105 {offsets = [0, 0], sizes = [8, 64], strides = [1, 1]} : vector<8x192xf32> to vector<8x64xf32>
    %109 = vector.extract_strided_slice %105 {offsets = [0, 64], sizes = [8, 64], strides = [1, 1]} : vector<8x192xf32> to vector<8x64xf32>
    %110 = vector.extract_strided_slice %105 {offsets = [0, 128], sizes = [8, 64], strides = [1, 1]} : vector<8x192xf32> to vector<8x64xf32>
    %111 = arith.mulf %109, %91 : vector<8x64xf32>
    %112 = arith.mulf %108, %107 : vector<8x64xf32>
    %113 = arith.addf %111, %112 : vector<8x64xf32>
    %114 = math.tanh %113 : vector<8x64xf32>
    %115 = arith.mulf %110, %114 : vector<8x64xf32>
    %116 = vector.extract_strided_slice %2 {offsets = [24, 0], sizes = [8, 64], strides = [1, 1]} : vector<64x64xi1> to vector<8x64xi1>
    %117 = arith.select %116, %115, %90 : vector<8x64xi1>, vector<8x64xf32>
    %118 = arith.select %116, %113, %91 : vector<8x64xi1>, vector<8x64xf32>
    %cst_28 = arith.constant 0.000000e+00 : f32
    %119 = vector.broadcast %cst_28 : f32 to vector<8x64xf32>
    %120 = arith.select %116, %115, %119 : vector<8x64xi1>, vector<8x64xf32>
    %c24 = arith.constant 24 : index
    %c0_29 = arith.constant 0 : index
    %121 = vector.load %arg6[%c24, %c0_29] : memref<64x128xf32, #tpu.memory_space<vmem>>, vector<8x64xf32>
    tpu.vector_store %arg6[%c24, %c0_29], %120 {strides = array<i32>} : memref<64x128xf32, #tpu.memory_space<vmem>>, vector<8x64xf32>,
    %c32 = arith.constant 32 : index
    %c64_30 = arith.constant 64 : index
    %122 = vector.load %arg6[%c32, %c64_30] : memref<64x128xf32, #tpu.memory_space<vmem>>, vector<8x64xf32>
    tpu.vector_store %arg6[%c32, %c64_30], %120 {strides = array<i32>} : memref<64x128xf32, #tpu.memory_space<vmem>>, vector<8x64xf32>,
    %123 = vector.extract_strided_slice %12 {offsets = [32, 0], sizes = [8, 256], strides = [1, 1]} : vector<64x256xf32> to vector<8x256xf32>
    %124 = arith.truncf %117 : vector<8x64xf32> to vector<8x64xbf16>
    %cst_31 = arith.constant dense<0.000000e+00> : vector<8x256xf32>
    %125 = tpu.matmul %124, %8, %cst_31 {dimension_numbers = #tpu.dot_dimension_numbers<[1], [0], [0], [1], [0, 0, 1, 1], [], []>} : vector<8x64xbf16>, vector<64x256xbf16>, vector<8x256xf32> -> vector<8x256xf32>
    %126 = arith.addf %123, %125 : vector<8x256xf32>
    %127 = vector.extract_strided_slice %126 {offsets = [0, 0], sizes = [8, 192], strides = [1, 1]} : vector<8x256xf32> to vector<8x192xf32>
    %128 = arith.negf %127 : vector<8x192xf32>
    %129 = math.exp %128 : vector<8x192xf32>
    %cst_32 = arith.constant 1.000000e+00 : f32
    %130 = vector.broadcast %cst_32 : f32 to vector<8x192xf32>
    %131 = arith.addf %130, %129 : vector<8x192xf32>
    %132 = arith.divf %130, %131 : vector<8x192xf32>
    %133 = vector.extract_strided_slice %126 {offsets = [0, 192], sizes = [8, 64], strides = [1, 1]} : vector<8x256xf32> to vector<8x64xf32>
    %134 = math.tanh %133 : vector<8x64xf32>
    %135 = vector.extract_strided_slice %132 {offsets = [0, 0], sizes = [8, 64], strides = [1, 1]} : vector<8x192xf32> to vector<8x64xf32>
    %136 = vector.extract_strided_slice %132 {offsets = [0, 64], sizes = [8, 64], strides = [1, 1]} : vector<8x192xf32> to vector<8x64xf32>
    %137 = vector.extract_strided_slice %132 {offsets = [0, 128], sizes = [8, 64], strides = [1, 1]} : vector<8x192xf32> to vector<8x64xf32>
    %138 = arith.mulf %136, %118 : vector<8x64xf32>
    %139 = arith.mulf %135, %134 : vector<8x64xf32>
    %140 = arith.addf %138, %139 : vector<8x64xf32>
    %141 = math.tanh %140 : vector<8x64xf32>
    %142 = arith.mulf %137, %141 : vector<8x64xf32>
    %143 = vector.extract_strided_slice %2 {offsets = [32, 0], sizes = [8, 64], strides = [1, 1]} : vector<64x64xi1> to vector<8x64xi1>
    %144 = arith.select %143, %142, %117 : vector<8x64xi1>, vector<8x64xf32>
    %145 = arith.select %143, %140, %118 : vector<8x64xi1>, vector<8x64xf32>
    %cst_33 = arith.constant 0.000000e+00 : f32
    %146 = vector.broadcast %cst_33 : f32 to vector<8x64xf32>
    %147 = arith.select %143, %142, %146 : vector<8x64xi1>, vector<8x64xf32>
    %c32_34 = arith.constant 32 : index
    %c0_35 = arith.constant 0 : index
    %148 = vector.load %arg6[%c32_34, %c0_35] : memref<64x128xf32, #tpu.memory_space<vmem>>, vector<8x64xf32>
    tpu.vector_store %arg6[%c32_34, %c0_35], %147 {strides = array<i32>} : memref<64x128xf32, #tpu.memory_space<vmem>>, vector<8x64xf32>,
    %c24_36 = arith.constant 24 : index
    %c64_37 = arith.constant 64 : index
    %149 = vector.load %arg6[%c24_36, %c64_37] : memref<64x128xf32, #tpu.memory_space<vmem>>, vector<8x64xf32>
    tpu.vector_store %arg6[%c24_36, %c64_37], %147 {strides = array<i32>} : memref<64x128xf32, #tpu.memory_space<vmem>>, vector<8x64xf32>,
    %150 = vector.extract_strided_slice %12 {offsets = [40, 0], sizes = [8, 256], strides = [1, 1]} : vector<64x256xf32> to vector<8x256xf32>
    %151 = arith.truncf %144 : vector<8x64xf32> to vector<8x64xbf16>
    %cst_38 = arith.constant dense<0.000000e+00> : vector<8x256xf32>
    %152 = tpu.matmul %151, %8, %cst_38 {dimension_numbers = #tpu.dot_dimension_numbers<[1], [0], [0], [1], [0, 0, 1, 1], [], []>} : vector<8x64xbf16>, vector<64x256xbf16>, vector<8x256xf32> -> vector<8x256xf32>
    %153 = arith.addf %150, %152 : vector<8x256xf32>
    %154 = vector.extract_strided_slice %153 {offsets = [0, 0], sizes = [8, 192], strides = [1, 1]} : vector<8x256xf32> to vector<8x192xf32>
    %155 = arith.negf %154 : vector<8x192xf32>
    %156 = math.exp %155 : vector<8x192xf32>
    %cst_39 = arith.constant 1.000000e+00 : f32
    %157 = vector.broadcast %cst_39 : f32 to vector<8x192xf32>
    %158 = arith.addf %157, %156 : vector<8x192xf32>
    %159 = arith.divf %157, %158 : vector<8x192xf32>
    %160 = vector.extract_strided_slice %153 {offsets = [0, 192], sizes = [8, 64], strides = [1, 1]} : vector<8x256xf32> to vector<8x64xf32>
    %161 = math.tanh %160 : vector<8x64xf32>
    %162 = vector.extract_strided_slice %159 {offsets = [0, 0], sizes = [8, 64], strides = [1, 1]} : vector<8x192xf32> to vector<8x64xf32>
    %163 = vector.extract_strided_slice %159 {offsets = [0, 64], sizes = [8, 64], strides = [1, 1]} : vector<8x192xf32> to vector<8x64xf32>
    %164 = vector.extract_strided_slice %159 {offsets = [0, 128], sizes = [8, 64], strides = [1, 1]} : vector<8x192xf32> to vector<8x64xf32>
    %165 = arith.mulf %163, %145 : vector<8x64xf32>
    %166 = arith.mulf %162, %161 : vector<8x64xf32>
    %167 = arith.addf %165, %166 : vector<8x64xf32>
    %168 = math.tanh %167 : vector<8x64xf32>
    %169 = arith.mulf %164, %168 : vector<8x64xf32>
    %170 = vector.extract_strided_slice %2 {offsets = [40, 0], sizes = [8, 64], strides = [1, 1]} : vector<64x64xi1> to vector<8x64xi1>
    %171 = arith.select %170, %169, %144 : vector<8x64xi1>, vector<8x64xf32>
    %172 = arith.select %170, %167, %145 : vector<8x64xi1>, vector<8x64xf32>
    %cst_40 = arith.constant 0.000000e+00 : f32
    %173 = vector.broadcast %cst_40 : f32 to vector<8x64xf32>
    %174 = arith.select %170, %169, %173 : vector<8x64xi1>, vector<8x64xf32>
    %c40_41 = arith.constant 40 : index
    %c0_42 = arith.constant 0 : index
    %175 = vector.load %arg6[%c40_41, %c0_42] : memref<64x128xf32, #tpu.memory_space<vmem>>, vector<8x64xf32>
    tpu.vector_store %arg6[%c40_41, %c0_42], %174 {strides = array<i32>} : memref<64x128xf32, #tpu.memory_space<vmem>>, vector<8x64xf32>,
    %c16_43 = arith.constant 16 : index
    %c64_44 = arith.constant 64 : index
    %176 = vector.load %arg6[%c16_43, %c64_44] : memref<64x128xf32, #tpu.memory_space<vmem>>, vector<8x64xf32>
    tpu.vector_store %arg6[%c16_43, %c64_44], %174 {strides = array<i32>} : memref<64x128xf32, #tpu.memory_space<vmem>>, vector<8x64xf32>,
    %177 = vector.extract_strided_slice %12 {offsets = [48, 0], sizes = [8, 256], strides = [1, 1]} : vector<64x256xf32> to vector<8x256xf32>
    %178 = arith.truncf %171 : vector<8x64xf32> to vector<8x64xbf16>
    %cst_45 = arith.constant dense<0.000000e+00> : vector<8x256xf32>
    %179 = tpu.matmul %178, %8, %cst_45 {dimension_numbers = #tpu.dot_dimension_numbers<[1], [0], [0], [1], [0, 0, 1, 1], [], []>} : vector<8x64xbf16>, vector<64x256xbf16>, vector<8x256xf32> -> vector<8x256xf32>
    %180 = arith.addf %177, %179 : vector<8x256xf32>
    %181 = vector.extract_strided_slice %180 {offsets = [0, 0], sizes = [8, 192], strides = [1, 1]} : vector<8x256xf32> to vector<8x192xf32>
    %182 = arith.negf %181 : vector<8x192xf32>
    %183 = math.exp %182 : vector<8x192xf32>
    %cst_46 = arith.constant 1.000000e+00 : f32
    %184 = vector.broadcast %cst_46 : f32 to vector<8x192xf32>
    %185 = arith.addf %184, %183 : vector<8x192xf32>
    %186 = arith.divf %184, %185 : vector<8x192xf32>
    %187 = vector.extract_strided_slice %180 {offsets = [0, 192], sizes = [8, 64], strides = [1, 1]} : vector<8x256xf32> to vector<8x64xf32>
    %188 = math.tanh %187 : vector<8x64xf32>
    %189 = vector.extract_strided_slice %186 {offsets = [0, 0], sizes = [8, 64], strides = [1, 1]} : vector<8x192xf32> to vector<8x64xf32>
    %190 = vector.extract_strided_slice %186 {offsets = [0, 64], sizes = [8, 64], strides = [1, 1]} : vector<8x192xf32> to vector<8x64xf32>
    %191 = vector.extract_strided_slice %186 {offsets = [0, 128], sizes = [8, 64], strides = [1, 1]} : vector<8x192xf32> to vector<8x64xf32>
    %192 = arith.mulf %190, %172 : vector<8x64xf32>
    %193 = arith.mulf %189, %188 : vector<8x64xf32>
    %194 = arith.addf %192, %193 : vector<8x64xf32>
    %195 = math.tanh %194 : vector<8x64xf32>
    %196 = arith.mulf %191, %195 : vector<8x64xf32>
    %197 = vector.extract_strided_slice %2 {offsets = [48, 0], sizes = [8, 64], strides = [1, 1]} : vector<64x64xi1> to vector<8x64xi1>
    %198 = arith.select %197, %196, %171 : vector<8x64xi1>, vector<8x64xf32>
    %199 = arith.select %197, %194, %172 : vector<8x64xi1>, vector<8x64xf32>
    %cst_47 = arith.constant 0.000000e+00 : f32
    %200 = vector.broadcast %cst_47 : f32 to vector<8x64xf32>
    %201 = arith.select %197, %196, %200 : vector<8x64xi1>, vector<8x64xf32>
    %c48_48 = arith.constant 48 : index
    %c0_49 = arith.constant 0 : index
    %202 = vector.load %arg6[%c48_48, %c0_49] : memref<64x128xf32, #tpu.memory_space<vmem>>, vector<8x64xf32>
    tpu.vector_store %arg6[%c48_48, %c0_49], %201 {strides = array<i32>} : memref<64x128xf32, #tpu.memory_space<vmem>>, vector<8x64xf32>,
    %c8_50 = arith.constant 8 : index
    %c64_51 = arith.constant 64 : index
    %203 = vector.load %arg6[%c8_50, %c64_51] : memref<64x128xf32, #tpu.memory_space<vmem>>, vector<8x64xf32>
    tpu.vector_store %arg6[%c8_50, %c64_51], %201 {strides = array<i32>} : memref<64x128xf32, #tpu.memory_space<vmem>>, vector<8x64xf32>,
    %204 = vector.extract_strided_slice %12 {offsets = [56, 0], sizes = [8, 256], strides = [1, 1]} : vector<64x256xf32> to vector<8x256xf32>
    %205 = arith.truncf %198 : vector<8x64xf32> to vector<8x64xbf16>
    %cst_52 = arith.constant dense<0.000000e+00> : vector<8x256xf32>
    %206 = tpu.matmul %205, %8, %cst_52 {dimension_numbers = #tpu.dot_dimension_numbers<[1], [0], [0], [1], [0, 0, 1, 1], [], []>} : vector<8x64xbf16>, vector<64x256xbf16>, vector<8x256xf32> -> vector<8x256xf32>
    %207 = arith.addf %204, %206 : vector<8x256xf32>
    %208 = vector.extract_strided_slice %207 {offsets = [0, 0], sizes = [8, 192], strides = [1, 1]} : vector<8x256xf32> to vector<8x192xf32>
    %209 = arith.negf %208 : vector<8x192xf32>
    %210 = math.exp %209 : vector<8x192xf32>
    %cst_53 = arith.constant 1.000000e+00 : f32
    %211 = vector.broadcast %cst_53 : f32 to vector<8x192xf32>
    %212 = arith.addf %211, %210 : vector<8x192xf32>
    %213 = arith.divf %211, %212 : vector<8x192xf32>
    %214 = vector.extract_strided_slice %207 {offsets = [0, 192], sizes = [8, 64], strides = [1, 1]} : vector<8x256xf32> to vector<8x64xf32>
    %215 = math.tanh %214 : vector<8x64xf32>
    %216 = vector.extract_strided_slice %213 {offsets = [0, 0], sizes = [8, 64], strides = [1, 1]} : vector<8x192xf32> to vector<8x64xf32>
    %217 = vector.extract_strided_slice %213 {offsets = [0, 64], sizes = [8, 64], strides = [1, 1]} : vector<8x192xf32> to vector<8x64xf32>
    %218 = vector.extract_strided_slice %213 {offsets = [0, 128], sizes = [8, 64], strides = [1, 1]} : vector<8x192xf32> to vector<8x64xf32>
    %219 = arith.mulf %217, %199 : vector<8x64xf32>
    %220 = arith.mulf %216, %215 : vector<8x64xf32>
    %221 = arith.addf %219, %220 : vector<8x64xf32>
    %222 = math.tanh %221 : vector<8x64xf32>
    %223 = arith.mulf %218, %222 : vector<8x64xf32>
    %224 = vector.extract_strided_slice %2 {offsets = [56, 0], sizes = [8, 64], strides = [1, 1]} : vector<64x64xi1> to vector<8x64xi1>
    %cst_54 = arith.constant 0.000000e+00 : f32
    %225 = vector.broadcast %cst_54 : f32 to vector<8x64xf32>
    %226 = arith.select %224, %223, %225 : vector<8x64xi1>, vector<8x64xf32>
    %c56_55 = arith.constant 56 : index
    %c0_56 = arith.constant 0 : index
    %227 = vector.load %arg6[%c56_55, %c0_56] : memref<64x128xf32, #tpu.memory_space<vmem>>, vector<8x64xf32>
    tpu.vector_store %arg6[%c56_55, %c0_56], %226 {strides = array<i32>} : memref<64x128xf32, #tpu.memory_space<vmem>>, vector<8x64xf32>,
    %c0_57 = arith.constant 0 : index
    %c64_58 = arith.constant 64 : index
    %228 = vector.load %arg6[%c0_57, %c64_58] : memref<64x128xf32, #tpu.memory_space<vmem>>, vector<8x64xf32>
    tpu.vector_store %arg6[%c0_57, %c64_58], %226 {strides = array<i32>} : memref<64x128xf32, #tpu.memory_space<vmem>>, vector<8x64xf32>,
    %c0_59 = arith.constant 0 : index
    %c0_60 = arith.constant 0 : index
    %229 = vector.load %arg6[%c0_59, %c0_60] : memref<64x128xf32, #tpu.memory_space<vmem>>, vector<64x128xf32>
    %230 = arith.truncf %229 : vector<64x128xf32> to vector<64x128xbf16>
    %c0_61 = arith.constant 0 : index
    %c0_62 = arith.constant 0 : index
    %231 = vector.load %arg3[%c0_61, %c0_62] : memref<193x256xf32, #tpu.memory_space<vmem>>, vector<128x256xf32>
    %232 = arith.truncf %231 : vector<128x256xf32> to vector<128x256xbf16>
    %c128_63 = arith.constant 128 : index
    %c0_64 = arith.constant 0 : index
    %233 = vector.load %arg3[%c128_63, %c0_64] : memref<193x256xf32, #tpu.memory_space<vmem>>, vector<64x256xf32>
    %234 = arith.truncf %233 : vector<64x256xf32> to vector<64x256xbf16>
    %c192 = arith.constant 192 : index
    %c0_65 = arith.constant 0 : index
    %235 = vector.load %arg3[%c192, %c0_65] : memref<193x256xf32, #tpu.memory_space<vmem>>, vector<1x256xf32>
    %cst_66 = arith.constant dense<0.000000e+00> : vector<64x256xf32>
    %236 = tpu.matmul %230, %232, %cst_66 {dimension_numbers = #tpu.dot_dimension_numbers<[1], [0], [0], [1], [0, 0, 1, 1], [], []>} : vector<64x128xbf16>, vector<128x256xbf16>, vector<64x256xf32> -> vector<64x256xf32>
    %237 = vector.broadcast %235 : vector<1x256xf32> to vector<64x256xf32>
    %238 = arith.addf %236, %237 : vector<64x256xf32>
    %cst_67 = arith.constant 0.000000e+00 : f32
    %239 = vector.broadcast %cst_67 : f32 to vector<8x64xf32>
    %cst_68 = arith.constant 0.000000e+00 : f32
    %240 = vector.broadcast %cst_68 : f32 to vector<8x64xf32>
    %241 = vector.extract_strided_slice %238 {offsets = [0, 0], sizes = [8, 256], strides = [1, 1]} : vector<64x256xf32> to vector<8x256xf32>
    %242 = arith.truncf %239 : vector<8x64xf32> to vector<8x64xbf16>
    %cst_69 = arith.constant dense<0.000000e+00> : vector<8x256xf32>
    %243 = tpu.matmul %242, %234, %cst_69 {dimension_numbers = #tpu.dot_dimension_numbers<[1], [0], [0], [1], [0, 0, 1, 1], [], []>} : vector<8x64xbf16>, vector<64x256xbf16>, vector<8x256xf32> -> vector<8x256xf32>
    %244 = arith.addf %241, %243 : vector<8x256xf32>
    %245 = vector.extract_strided_slice %244 {offsets = [0, 0], sizes = [8, 192], strides = [1, 1]} : vector<8x256xf32> to vector<8x192xf32>
    %246 = arith.negf %245 : vector<8x192xf32>
    %247 = math.exp %246 : vector<8x192xf32>
    %cst_70 = arith.constant 1.000000e+00 : f32
    %248 = vector.broadcast %cst_70 : f32 to vector<8x192xf32>
    %249 = arith.addf %248, %247 : vector<8x192xf32>
    %250 = arith.divf %248, %249 : vector<8x192xf32>
    %251 = vector.extract_strided_slice %244 {offsets = [0, 192], sizes = [8, 64], strides = [1, 1]} : vector<8x256xf32> to vector<8x64xf32>
    %252 = math.tanh %251 : vector<8x64xf32>
    %253 = vector.extract_strided_slice %250 {offsets = [0, 0], sizes = [8, 64], strides = [1, 1]} : vector<8x192xf32> to vector<8x64xf32>
    %254 = vector.extract_strided_slice %250 {offsets = [0, 64], sizes = [8, 64], strides = [1, 1]} : vector<8x192xf32> to vector<8x64xf32>
    %255 = vector.extract_strided_slice %250 {offsets = [0, 128], sizes = [8, 64], strides = [1, 1]} : vector<8x192xf32> to vector<8x64xf32>
    %256 = arith.mulf %254, %240 : vector<8x64xf32>
    %257 = arith.mulf %253, %252 : vector<8x64xf32>
    %258 = arith.addf %256, %257 : vector<8x64xf32>
    %259 = math.tanh %258 : vector<8x64xf32>
    %260 = arith.mulf %255, %259 : vector<8x64xf32>
    %261 = vector.extract_strided_slice %2 {offsets = [0, 0], sizes = [8, 64], strides = [1, 1]} : vector<64x64xi1> to vector<8x64xi1>
    %262 = arith.select %261, %260, %239 : vector<8x64xi1>, vector<8x64xf32>
    %263 = arith.select %261, %258, %240 : vector<8x64xi1>, vector<8x64xf32>
    %264 = vector.extract_strided_slice %238 {offsets = [8, 0], sizes = [8, 256], strides = [1, 1]} : vector<64x256xf32> to vector<8x256xf32>
    %265 = arith.truncf %262 : vector<8x64xf32> to vector<8x64xbf16>
    %cst_71 = arith.constant dense<0.000000e+00> : vector<8x256xf32>
    %266 = tpu.matmul %265, %234, %cst_71 {dimension_numbers = #tpu.dot_dimension_numbers<[1], [0], [0], [1], [0, 0, 1, 1], [], []>} : vector<8x64xbf16>, vector<64x256xbf16>, vector<8x256xf32> -> vector<8x256xf32>
    %267 = arith.addf %264, %266 : vector<8x256xf32>
    %268 = vector.extract_strided_slice %267 {offsets = [0, 0], sizes = [8, 192], strides = [1, 1]} : vector<8x256xf32> to vector<8x192xf32>
    %269 = arith.negf %268 : vector<8x192xf32>
    %270 = math.exp %269 : vector<8x192xf32>
    %cst_72 = arith.constant 1.000000e+00 : f32
    %271 = vector.broadcast %cst_72 : f32 to vector<8x192xf32>
    %272 = arith.addf %271, %270 : vector<8x192xf32>
    %273 = arith.divf %271, %272 : vector<8x192xf32>
    %274 = vector.extract_strided_slice %267 {offsets = [0, 192], sizes = [8, 64], strides = [1, 1]} : vector<8x256xf32> to vector<8x64xf32>
    %275 = math.tanh %274 : vector<8x64xf32>
    %276 = vector.extract_strided_slice %273 {offsets = [0, 0], sizes = [8, 64], strides = [1, 1]} : vector<8x192xf32> to vector<8x64xf32>
    %277 = vector.extract_strided_slice %273 {offsets = [0, 64], sizes = [8, 64], strides = [1, 1]} : vector<8x192xf32> to vector<8x64xf32>
    %278 = vector.extract_strided_slice %273 {offsets = [0, 128], sizes = [8, 64], strides = [1, 1]} : vector<8x192xf32> to vector<8x64xf32>
    %279 = arith.mulf %277, %263 : vector<8x64xf32>
    %280 = arith.mulf %276, %275 : vector<8x64xf32>
    %281 = arith.addf %279, %280 : vector<8x64xf32>
    %282 = math.tanh %281 : vector<8x64xf32>
    %283 = arith.mulf %278, %282 : vector<8x64xf32>
    %284 = vector.extract_strided_slice %2 {offsets = [8, 0], sizes = [8, 64], strides = [1, 1]} : vector<64x64xi1> to vector<8x64xi1>
    %285 = arith.select %284, %283, %262 : vector<8x64xi1>, vector<8x64xf32>
    %286 = arith.select %284, %281, %263 : vector<8x64xi1>, vector<8x64xf32>
    %287 = vector.extract_strided_slice %238 {offsets = [16, 0], sizes = [8, 256], strides = [1, 1]} : vector<64x256xf32> to vector<8x256xf32>
    %288 = arith.truncf %285 : vector<8x64xf32> to vector<8x64xbf16>
    %cst_73 = arith.constant dense<0.000000e+00> : vector<8x256xf32>
    %289 = tpu.matmul %288, %234, %cst_73 {dimension_numbers = #tpu.dot_dimension_numbers<[1], [0], [0], [1], [0, 0, 1, 1], [], []>} : vector<8x64xbf16>, vector<64x256xbf16>, vector<8x256xf32> -> vector<8x256xf32>
    %290 = arith.addf %287, %289 : vector<8x256xf32>
    %291 = vector.extract_strided_slice %290 {offsets = [0, 0], sizes = [8, 192], strides = [1, 1]} : vector<8x256xf32> to vector<8x192xf32>
    %292 = arith.negf %291 : vector<8x192xf32>
    %293 = math.exp %292 : vector<8x192xf32>
    %cst_74 = arith.constant 1.000000e+00 : f32
    %294 = vector.broadcast %cst_74 : f32 to vector<8x192xf32>
    %295 = arith.addf %294, %293 : vector<8x192xf32>
    %296 = arith.divf %294, %295 : vector<8x192xf32>
    %297 = vector.extract_strided_slice %290 {offsets = [0, 192], sizes = [8, 64], strides = [1, 1]} : vector<8x256xf32> to vector<8x64xf32>
    %298 = math.tanh %297 : vector<8x64xf32>
    %299 = vector.extract_strided_slice %296 {offsets = [0, 0], sizes = [8, 64], strides = [1, 1]} : vector<8x192xf32> to vector<8x64xf32>
    %300 = vector.extract_strided_slice %296 {offsets = [0, 64], sizes = [8, 64], strides = [1, 1]} : vector<8x192xf32> to vector<8x64xf32>
    %301 = vector.extract_strided_slice %296 {offsets = [0, 128], sizes = [8, 64], strides = [1, 1]} : vector<8x192xf32> to vector<8x64xf32>
    %302 = arith.mulf %300, %286 : vector<8x64xf32>
    %303 = arith.mulf %299, %298 : vector<8x64xf32>
    %304 = arith.addf %302, %303 : vector<8x64xf32>
    %305 = math.tanh %304 : vector<8x64xf32>
    %306 = arith.mulf %301, %305 : vector<8x64xf32>
    %307 = vector.extract_strided_slice %2 {offsets = [16, 0], sizes = [8, 64], strides = [1, 1]} : vector<64x64xi1> to vector<8x64xi1>
    %308 = arith.select %307, %306, %285 : vector<8x64xi1>, vector<8x64xf32>
    %309 = arith.select %307, %304, %286 : vector<8x64xi1>, vector<8x64xf32>
    %310 = vector.extract_strided_slice %238 {offsets = [24, 0], sizes = [8, 256], strides = [1, 1]} : vector<64x256xf32> to vector<8x256xf32>
    %311 = arith.truncf %308 : vector<8x64xf32> to vector<8x64xbf16>
    %cst_75 = arith.constant dense<0.000000e+00> : vector<8x256xf32>
    %312 = tpu.matmul %311, %234, %cst_75 {dimension_numbers = #tpu.dot_dimension_numbers<[1], [0], [0], [1], [0, 0, 1, 1], [], []>} : vector<8x64xbf16>, vector<64x256xbf16>, vector<8x256xf32> -> vector<8x256xf32>
    %313 = arith.addf %310, %312 : vector<8x256xf32>
    %314 = vector.extract_strided_slice %313 {offsets = [0, 0], sizes = [8, 192], strides = [1, 1]} : vector<8x256xf32> to vector<8x192xf32>
    %315 = arith.negf %314 : vector<8x192xf32>
    %316 = math.exp %315 : vector<8x192xf32>
    %cst_76 = arith.constant 1.000000e+00 : f32
    %317 = vector.broadcast %cst_76 : f32 to vector<8x192xf32>
    %318 = arith.addf %317, %316 : vector<8x192xf32>
    %319 = arith.divf %317, %318 : vector<8x192xf32>
    %320 = vector.extract_strided_slice %313 {offsets = [0, 192], sizes = [8, 64], strides = [1, 1]} : vector<8x256xf32> to vector<8x64xf32>
    %321 = math.tanh %320 : vector<8x64xf32>
    %322 = vector.extract_strided_slice %319 {offsets = [0, 0], sizes = [8, 64], strides = [1, 1]} : vector<8x192xf32> to vector<8x64xf32>
    %323 = vector.extract_strided_slice %319 {offsets = [0, 64], sizes = [8, 64], strides = [1, 1]} : vector<8x192xf32> to vector<8x64xf32>
    %324 = vector.extract_strided_slice %319 {offsets = [0, 128], sizes = [8, 64], strides = [1, 1]} : vector<8x192xf32> to vector<8x64xf32>
    %325 = arith.mulf %323, %309 : vector<8x64xf32>
    %326 = arith.mulf %322, %321 : vector<8x64xf32>
    %327 = arith.addf %325, %326 : vector<8x64xf32>
    %328 = math.tanh %327 : vector<8x64xf32>
    %329 = arith.mulf %324, %328 : vector<8x64xf32>
    %330 = vector.extract_strided_slice %2 {offsets = [24, 0], sizes = [8, 64], strides = [1, 1]} : vector<64x64xi1> to vector<8x64xi1>
    %331 = arith.select %330, %329, %308 : vector<8x64xi1>, vector<8x64xf32>
    %332 = arith.select %330, %327, %309 : vector<8x64xi1>, vector<8x64xf32>
    %333 = vector.extract_strided_slice %238 {offsets = [32, 0], sizes = [8, 256], strides = [1, 1]} : vector<64x256xf32> to vector<8x256xf32>
    %334 = arith.truncf %331 : vector<8x64xf32> to vector<8x64xbf16>
    %cst_77 = arith.constant dense<0.000000e+00> : vector<8x256xf32>
    %335 = tpu.matmul %334, %234, %cst_77 {dimension_numbers = #tpu.dot_dimension_numbers<[1], [0], [0], [1], [0, 0, 1, 1], [], []>} : vector<8x64xbf16>, vector<64x256xbf16>, vector<8x256xf32> -> vector<8x256xf32>
    %336 = arith.addf %333, %335 : vector<8x256xf32>
    %337 = vector.extract_strided_slice %336 {offsets = [0, 0], sizes = [8, 192], strides = [1, 1]} : vector<8x256xf32> to vector<8x192xf32>
    %338 = arith.negf %337 : vector<8x192xf32>
    %339 = math.exp %338 : vector<8x192xf32>
    %cst_78 = arith.constant 1.000000e+00 : f32
    %340 = vector.broadcast %cst_78 : f32 to vector<8x192xf32>
    %341 = arith.addf %340, %339 : vector<8x192xf32>
    %342 = arith.divf %340, %341 : vector<8x192xf32>
    %343 = vector.extract_strided_slice %336 {offsets = [0, 192], sizes = [8, 64], strides = [1, 1]} : vector<8x256xf32> to vector<8x64xf32>
    %344 = math.tanh %343 : vector<8x64xf32>
    %345 = vector.extract_strided_slice %342 {offsets = [0, 0], sizes = [8, 64], strides = [1, 1]} : vector<8x192xf32> to vector<8x64xf32>
    %346 = vector.extract_strided_slice %342 {offsets = [0, 64], sizes = [8, 64], strides = [1, 1]} : vector<8x192xf32> to vector<8x64xf32>
    %347 = vector.extract_strided_slice %342 {offsets = [0, 128], sizes = [8, 64], strides = [1, 1]} : vector<8x192xf32> to vector<8x64xf32>
    %348 = arith.mulf %346, %332 : vector<8x64xf32>
    %349 = arith.mulf %345, %344 : vector<8x64xf32>
    %350 = arith.addf %348, %349 : vector<8x64xf32>
    %351 = math.tanh %350 : vector<8x64xf32>
    %352 = arith.mulf %347, %351 : vector<8x64xf32>
    %353 = vector.extract_strided_slice %2 {offsets = [32, 0], sizes = [8, 64], strides = [1, 1]} : vector<64x64xi1> to vector<8x64xi1>
    %354 = arith.select %353, %352, %331 : vector<8x64xi1>, vector<8x64xf32>
    %355 = arith.select %353, %350, %332 : vector<8x64xi1>, vector<8x64xf32>
    %356 = vector.extract_strided_slice %238 {offsets = [40, 0], sizes = [8, 256], strides = [1, 1]} : vector<64x256xf32> to vector<8x256xf32>
    %357 = arith.truncf %354 : vector<8x64xf32> to vector<8x64xbf16>
    %cst_79 = arith.constant dense<0.000000e+00> : vector<8x256xf32>
    %358 = tpu.matmul %357, %234, %cst_79 {dimension_numbers = #tpu.dot_dimension_numbers<[1], [0], [0], [1], [0, 0, 1, 1], [], []>} : vector<8x64xbf16>, vector<64x256xbf16>, vector<8x256xf32> -> vector<8x256xf32>
    %359 = arith.addf %356, %358 : vector<8x256xf32>
    %360 = vector.extract_strided_slice %359 {offsets = [0, 0], sizes = [8, 192], strides = [1, 1]} : vector<8x256xf32> to vector<8x192xf32>
    %361 = arith.negf %360 : vector<8x192xf32>
    %362 = math.exp %361 : vector<8x192xf32>
    %cst_80 = arith.constant 1.000000e+00 : f32
    %363 = vector.broadcast %cst_80 : f32 to vector<8x192xf32>
    %364 = arith.addf %363, %362 : vector<8x192xf32>
    %365 = arith.divf %363, %364 : vector<8x192xf32>
    %366 = vector.extract_strided_slice %359 {offsets = [0, 192], sizes = [8, 64], strides = [1, 1]} : vector<8x256xf32> to vector<8x64xf32>
    %367 = math.tanh %366 : vector<8x64xf32>
    %368 = vector.extract_strided_slice %365 {offsets = [0, 0], sizes = [8, 64], strides = [1, 1]} : vector<8x192xf32> to vector<8x64xf32>
    %369 = vector.extract_strided_slice %365 {offsets = [0, 64], sizes = [8, 64], strides = [1, 1]} : vector<8x192xf32> to vector<8x64xf32>
    %370 = vector.extract_strided_slice %365 {offsets = [0, 128], sizes = [8, 64], strides = [1, 1]} : vector<8x192xf32> to vector<8x64xf32>
    %371 = arith.mulf %369, %355 : vector<8x64xf32>
    %372 = arith.mulf %368, %367 : vector<8x64xf32>
    %373 = arith.addf %371, %372 : vector<8x64xf32>
    %374 = math.tanh %373 : vector<8x64xf32>
    %375 = arith.mulf %370, %374 : vector<8x64xf32>
    %376 = vector.extract_strided_slice %2 {offsets = [40, 0], sizes = [8, 64], strides = [1, 1]} : vector<64x64xi1> to vector<8x64xi1>
    %377 = arith.select %376, %375, %354 : vector<8x64xi1>, vector<8x64xf32>
    %378 = arith.select %376, %373, %355 : vector<8x64xi1>, vector<8x64xf32>
    %379 = vector.extract_strided_slice %238 {offsets = [48, 0], sizes = [8, 256], strides = [1, 1]} : vector<64x256xf32> to vector<8x256xf32>
    %380 = arith.truncf %377 : vector<8x64xf32> to vector<8x64xbf16>
    %cst_81 = arith.constant dense<0.000000e+00> : vector<8x256xf32>
    %381 = tpu.matmul %380, %234, %cst_81 {dimension_numbers = #tpu.dot_dimension_numbers<[1], [0], [0], [1], [0, 0, 1, 1], [], []>} : vector<8x64xbf16>, vector<64x256xbf16>, vector<8x256xf32> -> vector<8x256xf32>
    %382 = arith.addf %379, %381 : vector<8x256xf32>
    %383 = vector.extract_strided_slice %382 {offsets = [0, 0], sizes = [8, 192], strides = [1, 1]} : vector<8x256xf32> to vector<8x192xf32>
    %384 = arith.negf %383 : vector<8x192xf32>
    %385 = math.exp %384 : vector<8x192xf32>
    %cst_82 = arith.constant 1.000000e+00 : f32
    %386 = vector.broadcast %cst_82 : f32 to vector<8x192xf32>
    %387 = arith.addf %386, %385 : vector<8x192xf32>
    %388 = arith.divf %386, %387 : vector<8x192xf32>
    %389 = vector.extract_strided_slice %382 {offsets = [0, 192], sizes = [8, 64], strides = [1, 1]} : vector<8x256xf32> to vector<8x64xf32>
    %390 = math.tanh %389 : vector<8x64xf32>
    %391 = vector.extract_strided_slice %388 {offsets = [0, 0], sizes = [8, 64], strides = [1, 1]} : vector<8x192xf32> to vector<8x64xf32>
    %392 = vector.extract_strided_slice %388 {offsets = [0, 64], sizes = [8, 64], strides = [1, 1]} : vector<8x192xf32> to vector<8x64xf32>
    %393 = vector.extract_strided_slice %388 {offsets = [0, 128], sizes = [8, 64], strides = [1, 1]} : vector<8x192xf32> to vector<8x64xf32>
    %394 = arith.mulf %392, %378 : vector<8x64xf32>
    %395 = arith.mulf %391, %390 : vector<8x64xf32>
    %396 = arith.addf %394, %395 : vector<8x64xf32>
    %397 = math.tanh %396 : vector<8x64xf32>
    %398 = arith.mulf %393, %397 : vector<8x64xf32>
    %399 = vector.extract_strided_slice %2 {offsets = [48, 0], sizes = [8, 64], strides = [1, 1]} : vector<64x64xi1> to vector<8x64xi1>
    %400 = arith.select %399, %398, %377 : vector<8x64xi1>, vector<8x64xf32>
    %401 = arith.select %399, %396, %378 : vector<8x64xi1>, vector<8x64xf32>
    %402 = vector.extract_strided_slice %238 {offsets = [56, 0], sizes = [8, 256], strides = [1, 1]} : vector<64x256xf32> to vector<8x256xf32>
    %403 = arith.truncf %400 : vector<8x64xf32> to vector<8x64xbf16>
    %cst_83 = arith.constant dense<0.000000e+00> : vector<8x256xf32>
    %404 = tpu.matmul %403, %234, %cst_83 {dimension_numbers = #tpu.dot_dimension_numbers<[1], [0], [0], [1], [0, 0, 1, 1], [], []>} : vector<8x64xbf16>, vector<64x256xbf16>, vector<8x256xf32> -> vector<8x256xf32>
    %405 = arith.addf %402, %404 : vector<8x256xf32>
    %406 = vector.extract_strided_slice %405 {offsets = [0, 0], sizes = [8, 192], strides = [1, 1]} : vector<8x256xf32> to vector<8x192xf32>
    %407 = arith.negf %406 : vector<8x192xf32>
    %408 = math.exp %407 : vector<8x192xf32>
    %cst_84 = arith.constant 1.000000e+00 : f32
    %409 = vector.broadcast %cst_84 : f32 to vector<8x192xf32>
    %410 = arith.addf %409, %408 : vector<8x192xf32>
    %411 = arith.divf %409, %410 : vector<8x192xf32>
    %412 = vector.extract_strided_slice %405 {offsets = [0, 192], sizes = [8, 64], strides = [1, 1]} : vector<8x256xf32> to vector<8x64xf32>
    %413 = math.tanh %412 : vector<8x64xf32>
    %414 = vector.extract_strided_slice %411 {offsets = [0, 0], sizes = [8, 64], strides = [1, 1]} : vector<8x192xf32> to vector<8x64xf32>
    %415 = vector.extract_strided_slice %411 {offsets = [0, 64], sizes = [8, 64], strides = [1, 1]} : vector<8x192xf32> to vector<8x64xf32>
    %416 = vector.extract_strided_slice %411 {offsets = [0, 128], sizes = [8, 64], strides = [1, 1]} : vector<8x192xf32> to vector<8x64xf32>
    %417 = arith.mulf %415, %401 : vector<8x64xf32>
    %418 = arith.mulf %414, %413 : vector<8x64xf32>
    %419 = arith.addf %417, %418 : vector<8x64xf32>
    %420 = math.tanh %419 : vector<8x64xf32>
    %421 = arith.mulf %416, %420 : vector<8x64xf32>
    %422 = vector.extract_strided_slice %2 {offsets = [56, 0], sizes = [8, 64], strides = [1, 1]} : vector<64x64xi1> to vector<8x64xi1>
    %423 = arith.select %422, %421, %400 : vector<8x64xi1>, vector<8x64xf32>
    %c0_85 = arith.constant 0 : index
    %c0_86 = arith.constant 0 : index
    %424 = vector.load %arg4[%c0_85, %c0_86] : memref<65x128xf32, #tpu.memory_space<vmem>>, vector<64x128xf32>
    %c64_87 = arith.constant 64 : index
    %c0_88 = arith.constant 0 : index
    %425 = vector.load %arg4[%c64_87, %c0_88] : memref<65x128xf32, #tpu.memory_space<vmem>>, vector<1x128xf32>
    %cst_89 = arith.constant dense<0.000000e+00> : vector<8x128xf32>
    %426 = tpu.matmul %423, %424, %cst_89 {dimension_numbers = #tpu.dot_dimension_numbers<[1], [0], [0], [1], [0, 0, 1, 1], [], []>} : vector<8x64xf32>, vector<64x128xf32>, vector<8x128xf32> -> vector<8x128xf32>
    %427 = vector.broadcast %425 : vector<1x128xf32> to vector<8x128xf32>
    %428 = arith.addf %426, %427 : vector<8x128xf32>
    %c0_90 = arith.constant 0 : index
    %c0_91 = arith.constant 0 : index
    %429 = vector.load %arg5[%c0_90, %c0_91] : memref<8x128xf32, #tpu.memory_space<vmem>>, vector<8x128xf32>
    tpu.vector_store %arg5[%c0_90, %c0_91], %428 {strides = array<i32>} : memref<8x128xf32, #tpu.memory_space<vmem>>, vector<8x128xf32>,
    return
  }
}

</mosaic_0001>

<llo_original>
// kernel: rnn_forward.1
$region0: #{rnn_forward.1}
  #allocation0 [shape = 'u32[]', space=smem, size = 0x4, offset = 0x4, fixed_abs, tag = 'smem constant byte address 0x4 - core index']
  #allocation1 [shape = 'u32[144,128]{1,0:T(1,128)}', space=vmem, size = 0x12000, scoped, tag = 'internal scratch']
  #allocation2 [shape = 'f32[64,128]{1,0:T(8,128)}', space=vmem, size = 0x8000, scoped, tag = 'scratch operand']
  %s0 = inlined_call_operand.vmem [shape: f32[64,64], index: 0, kind: input, shape index: {}]
  %s1 = inlined_call_operand.vmem [shape: f32[64,64], index: 1, kind: input, shape index: {}]
  %s2 = inlined_call_operand.vmem [shape: f32[129,256], index: 2, kind: input, shape index: {}]
  %s3 = inlined_call_operand.vmem [shape: f32[193,256], index: 3, kind: input, shape index: {}]
  %s4 = inlined_call_operand.vmem [shape: f32[65,128], index: 4, kind: input, shape index: {}]
  %s5 = inlined_call_operand.vmem [shape: f32[8,128], index: 5, kind: output, shape index: {}]
  %s6 = sld [smem:[#allocation0]]
  $region30: #{rnn_forward.1} parent=0
    _
  %s8 = ssub.s32 1, %s6
  %s9 = scalar_select 0, %s8, %s6
  // Predicated region
  $region2: #{rnn_forward.1} parent=0 // pred_check
    _
  $region3: #{rnn_forward.1} parent=0 // pred_check_branch
    %11 = sbr.rel (0) target = $region5
  $region4: #{rnn_forward.1} parent=0 // pred_region
    _
  $region5: #{rnn_forward.1} parent=0 // pred_fallthru
    _
  // Predicated region
  $region6: #{rnn_forward.1} parent=0 // pred_check
    _
  $region7: #{rnn_forward.1} parent=0 // pred_check_branch
    %13 = sbr.rel (0) target = $region9
  $region8: #{rnn_forward.1} parent=0 // pred_region
    _
  $region9: #{rnn_forward.1} parent=0 // pred_fallthru
    _
  // Predicated region
  $region10: #{rnn_forward.1} parent=0 // pred_check
    _
  $region11: #{rnn_forward.1} parent=0 // pred_check_branch
    %15 = sbr.rel (0) target = $region13
  $region12: #{rnn_forward.1} parent=0 // pred_region
    _
  $region13: #{rnn_forward.1} parent=0 // pred_fallthru
    _
  // Predicated region
  $region14: #{rnn_forward.1} parent=0 // pred_check
    _
  $region15: #{rnn_forward.1} parent=0 // pred_check_branch
    %17 = sbr.rel (0) target = $region17
  $region16: #{rnn_forward.1} parent=0 // pred_region
    _
  $region17: #{rnn_forward.1} parent=0 // pred_fallthru
    _
  // Predicated region
  $region18: #{rnn_forward.1} parent=0 // pred_check
    _
  $region19: #{rnn_forward.1} parent=0 // pred_check_branch
    %19 = sbr.rel (0) target = $region21
  $region20: #{rnn_forward.1} parent=0 // pred_region
    _
  $region21: #{rnn_forward.1} parent=0 // pred_fallthru
    _
  %v21 = vld [vmem:[%s1] sm:$0xff]
  %v22 = vld [vmem:[%s1 + $0x8] sm:$0xff]
  %v23 = vld [vmem:[%s1 + $0x10] sm:$0xff]
  %v24 = vld [vmem:[%s1 + $0x18] sm:$0xff]
  %v25 = vld [vmem:[%s1 + $0x20] sm:$0xff]
  %v26 = vld [vmem:[%s1 + $0x28] sm:$0xff]
  %v27 = vld [vmem:[%s1 + $0x30] sm:$0xff]
  %v28 = vld [vmem:[%s1 + $0x38] sm:$0xff]
  %vm29 = vcmp.gt.f32.partialorder %v21, 0.5
  %vm30 = vcmp.gt.f32.partialorder %v22, 0.5
  %vm31 = vcmp.gt.f32.partialorder %v23, 0.5
  %vm32 = vcmp.gt.f32.partialorder %v24, 0.5
  %vm33 = vcmp.gt.f32.partialorder %v25, 0.5
  %vm34 = vcmp.gt.f32.partialorder %v26, 0.5
  %vm35 = vcmp.gt.f32.partialorder %v27, 0.5
  %vm36 = vcmp.gt.f32.partialorder %v28, 0.5
  %v37 = vld [vmem:[%s0] sm:$0xff]
  %v38 = vld [vmem:[%s0 + $0x8] sm:$0xff]
  %v39 = vld [vmem:[%s0 + $0x10] sm:$0xff]
  %v40 = vld [vmem:[%s0 + $0x18] sm:$0xff]
  %v41 = vld [vmem:[%s0 + $0x20] sm:$0xff]
  %v42 = vld [vmem:[%s0 + $0x28] sm:$0xff]
  %v43 = vld [vmem:[%s0 + $0x30] sm:$0xff]
  %v44 = vld [vmem:[%s0 + $0x38] sm:$0xff]
  %v45 = vpack.c.bf16 %v38, %v37
  %v46 = vpack.c.bf16 %v40, %v39
  %v47 = vpack.c.bf16 %v42, %v41
  %v48 = vpack.c.bf16 %v44, %v43
  %v49 = vld [vmem:[%s2] sm:$0xff]
  %v50 = vld [vmem:[%s2 + $0x8] sm:$0xff]
  %v51 = vld [vmem:[%s2 + $0x10] sm:$0xff]
  %v52 = vld [vmem:[%s2 + $0x18] sm:$0xff]
  %v53 = vld [vmem:[%s2 + $0x20] sm:$0xff]
  %v54 = vld [vmem:[%s2 + $0x28] sm:$0xff]
  %v55 = vld [vmem:[%s2 + $0x30] sm:$0xff]
  %v56 = vld [vmem:[%s2 + $0x38] sm:$0xff]
  %v57 = vld [vmem:[%s2 + $0x40] sm:$0xff]
  %v58 = vld [vmem:[%s2 + $0x48] sm:$0xff]
  %v59 = vld [vmem:[%s2 + $0x50] sm:$0xff]
  %v60 = vld [vmem:[%s2 + $0x58] sm:$0xff]
  %v61 = vld [vmem:[%s2 + $0x60] sm:$0xff]
  %v62 = vld [vmem:[%s2 + $0x68] sm:$0xff]
  %v63 = vld [vmem:[%s2 + $0x70] sm:$0xff]
  %v64 = vld [vmem:[%s2 + $0x78] sm:$0xff]
  %v65 = vpack.c.bf16 %v51, %v49
  %v66 = vpack.c.bf16 %v52, %v50
  %v67 = vpack.c.bf16 %v55, %v53
  %v68 = vpack.c.bf16 %v56, %v54
  %v69 = vpack.c.bf16 %v59, %v57
  %v70 = vpack.c.bf16 %v60, %v58
  %v71 = vpack.c.bf16 %v63, %v61
  %v72 = vpack.c.bf16 %v64, %v62
  %v73 = vld [vmem:[%s2 + $0x80] sm:$0xff]
  %v74 = vld [vmem:[%s2 + $0x88] sm:$0xff]
  %v75 = vld [vmem:[%s2 + $0x90] sm:$0xff]
  %v76 = vld [vmem:[%s2 + $0x98] sm:$0xff]
  %v77 = vld [vmem:[%s2 + $0xa0] sm:$0xff]
  %v78 = vld [vmem:[%s2 + $0xa8] sm:$0xff]
  %v79 = vld [vmem:[%s2 + $0xb0] sm:$0xff]
  %v80 = vld [vmem:[%s2 + $0xb8] sm:$0xff]
  %v81 = vld [vmem:[%s2 + $0xc0] sm:$0xff]
  %v82 = vld [vmem:[%s2 + $0xc8] sm:$0xff]
  %v83 = vld [vmem:[%s2 + $0xd0] sm:$0xff]
  %v84 = vld [vmem:[%s2 + $0xd8] sm:$0xff]
  %v85 = vld [vmem:[%s2 + $0xe0] sm:$0xff]
  %v86 = vld [vmem:[%s2 + $0xe8] sm:$0xff]
  %v87 = vld [vmem:[%s2 + $0xf0] sm:$0xff]
  %v88 = vld [vmem:[%s2 + $0xf8] sm:$0xff]
  %v89 = vpack.c.bf16 %v75, %v73
  %v90 = vpack.c.bf16 %v76, %v74
  %v91 = vpack.c.bf16 %v79, %v77
  %v92 = vpack.c.bf16 %v80, %v78
  %v93 = vpack.c.bf16 %v83, %v81
  %v94 = vpack.c.bf16 %v84, %v82
  %v95 = vpack.c.bf16 %v87, %v85
  %v96 = vpack.c.bf16 %v88, %v86
  %s97 = scalar_lea.vmem %s2, 256
  %v98 = vld [vmem:[%s97] ss:$8 sm:$0x3]
  %v100 = vlaneseq
  %v101 = vshrl.u32 %v100, 7
  %v102 = vsub.s32 0, %v101
  %v103 = vrot.slane %v98, %v102
  %v104 = vlaneseq
  %v105 = vshrl.u32 %v104, 7
  %v106 = vsub.s32 1, %v105
  %v107 = vrot.slane %v98, %v106
  %vm110 = vcmask 523264
  %v112 = vsel %vm110, %v45, 0
  %v115 = vsel %vm110, %v46, 0
  %v118 = vsel %vm110, %v47, 0
  %v121 = vsel %vm110, %v48, 0
  %123 = vmatprep.subr.bf16.mxu0 0
  %124 = vmatpush1.bf16.msra.mxu0 0
  %125 = vmatprep.subr.bf16.mxu0 0
  %126 = vmatpush1.bf16.msra.mxu0 0
  %127 = vmatprep.subr.bf16.mxu0 0
  %128 = vmatpush1.bf16.msra.mxu0 0
  %129 = vmatprep.subr.bf16.mxu0 0
  %130 = vmatpush1.bf16.msra.mxu0 0
  %131 = vmatprep.subr.bf16.mxu0 %v72
  %132 = vmatpush1.bf16.msra.mxu0 %v71
  %133 = vmatprep.subr.bf16.mxu0 %v70
  %134 = vmatpush1.bf16.msra.mxu0 %v69
  %135 = vmatprep.subr.bf16.mxu0 %v68
  %136 = vmatpush1.bf16.msra.mxu0 %v67
  %137 = vmatprep.subr.bf16.mxu0 %v66
  %138 = vmatpush1.bf16.msra.mxu0 %v65
  %139 = vmatprep.subr.bf16.mxu0 0
  %140 = vmatpush2.bf16.msra.mxu0 0
  %141 = vmatprep.subr.bf16.mxu0 0
  %142 = vmatpush2.bf16.msra.mxu0 0
  %143 = vmatprep.subr.bf16.mxu0 0
  %144 = vmatpush2.bf16.msra.mxu0 0
  %145 = vmatprep.subr.bf16.mxu0 0
  %146 = vmatpush2.bf16.msra.mxu0 0
  %147 = vmatprep.subr.bf16.mxu0 0
  %148 = vmatpush2.bf16.msra.mxu0 0
  %149 = vmatprep.subr.bf16.mxu0 0
  %150 = vmatpush2.bf16.msra.mxu0 0
  %151 = vmatprep.subr.bf16.mxu0 0
  %152 = vmatpush2.bf16.msra.mxu0 0
  %153 = vmatprep.subr.bf16.mxu0 0
  %154 = vmatpush2.bf16.msra.mxu0 0
  %155 = vmatprep.mubr.bf16.mxu0 0
  %156 = vmatmul.mubr.bf16.gmra.mxu0 %v112
  %v157 = vpop.f32.mrf.mxu0
  %v158 = vadd.f32 %v103, %v157
  %v159 = vpop.f32.mrf.mxu0
  %v160 = vadd.f32 %v107, %v159
  %v161 = vpop.f32.mrf.mxu0
  %v162 = vadd.f32 %v103, %v161
  %v163 = vpop.f32.mrf.mxu0
  %v164 = vadd.f32 %v107, %v163
  %165 = vmatprep.mubr.bf16.mxu0 0
  %166 = vmatmul.mubr.bf16.gmra.mxu0 %v115
  %v167 = vpop.f32.mrf.mxu0
  %v168 = vadd.f32 %v103, %v167
  %v169 = vpop.f32.mrf.mxu0
  %v170 = vadd.f32 %v107, %v169
  %v171 = vpop.f32.mrf.mxu0
  %v172 = vadd.f32 %v103, %v171
  %v173 = vpop.f32.mrf.mxu0
  %v174 = vadd.f32 %v107, %v173
  %175 = vmatprep.mubr.bf16.mxu0 0
  %176 = vmatmul.mubr.bf16.gmra.mxu0 %v118
  %v177 = vpop.f32.mrf.mxu0
  %v178 = vadd.f32 %v103, %v177
  %v179 = vpop.f32.mrf.mxu0
  %v180 = vadd.f32 %v107, %v179
  %v181 = vpop.f32.mrf.mxu0
  %v182 = vadd.f32 %v103, %v181
  %v183 = vpop.f32.mrf.mxu0
  %v184 = vadd.f32 %v107, %v183
  %185 = vmatprep.mubr.bf16.mxu0 0
  %186 = vmatmul.mubr.bf16.gmra.mxu0 %v121
  %v187 = vpop.f32.mrf.mxu0
  %v188 = vadd.f32 %v103, %v187
  %v189 = vpop.f32.mrf.mxu0
  %v190 = vadd.f32 %v107, %v189
  %v191 = vpop.f32.mrf.mxu0
  %v192 = vadd.f32 %v103, %v191
  %v193 = vpop.f32.mrf.mxu0
  %v194 = vadd.f32 %v107, %v193
  %195 = vdwg.mxu0
  %v197 = vsel %vm110, 0, 0
  %199 = vmatprep.subr.bf16.mxu0 0
  %200 = vmatpush1.bf16.msra.mxu0 0
  %201 = vmatprep.subr.bf16.mxu0 0
  %202 = vmatpush1.bf16.msra.mxu0 0
  %203 = vmatprep.subr.bf16.mxu0 0
  %204 = vmatpush1.bf16.msra.mxu0 0
  %205 = vmatprep.subr.bf16.mxu0 0
  %206 = vmatpush1.bf16.msra.mxu0 0
  %207 = vmatprep.subr.bf16.mxu0 %v96
  %208 = vmatpush1.bf16.msra.mxu0 %v95
  %209 = vmatprep.subr.bf16.mxu0 %v94
  %210 = vmatpush1.bf16.msra.mxu0 %v93
  %211 = vmatprep.subr.bf16.mxu0 %v92
  %212 = vmatpush1.bf16.msra.mxu0 %v91
  %213 = vmatprep.subr.bf16.mxu0 %v90
  %214 = vmatpush1.bf16.msra.mxu0 %v89
  %215 = vmatprep.subr.bf16.mxu0 0
  %216 = vmatpush2.bf16.msra.mxu0 0
  %217 = vmatprep.subr.bf16.mxu0 0
  %218 = vmatpush2.bf16.msra.mxu0 0
  %219 = vmatprep.subr.bf16.mxu0 0
  %220 = vmatpush2.bf16.msra.mxu0 0
  %221 = vmatprep.subr.bf16.mxu0 0
  %222 = vmatpush2.bf16.msra.mxu0 0
  %223 = vmatprep.subr.bf16.mxu0 0
  %224 = vmatpush2.bf16.msra.mxu0 0
  %225 = vmatprep.subr.bf16.mxu0 0
  %226 = vmatpush2.bf16.msra.mxu0 0
  %227 = vmatprep.subr.bf16.mxu0 0
  %228 = vmatpush2.bf16.msra.mxu0 0
  %229 = vmatprep.subr.bf16.mxu0 0
  %230 = vmatpush2.bf16.msra.mxu0 0
  %231 = vmatprep.mubr.bf16.mxu0 0
  %232 = vmatmul.mubr.bf16.gmra.mxu0 %v197
  %v233 = vpop.f32.mrf.mxu0
  %v234 = vadd.f32 0.0, %v233
  %v235 = vpop.f32.mrf.mxu0
  %v236 = vadd.f32 0.0, %v235
  %v237 = vpop.f32.mrf.mxu0
  %v238 = vpop.f32.mrf.mxu0
  %239 = vdwg.mxu0
  %v240 = vadd.f32 %v158, %v234
  %v241 = vadd.f32 %v160, %v236
  %v242 = vxor.u32 %v240, 2147483648
  %v243 = vxor.u32 %v241, 2147483648
  %v244 = vmul.f32 %v242, 1.442695
  %v245 = vpow.pop %v244
  %v246 = vmul.f32 %v243, 1.442695
  %v247 = vpow.pop %v246
  %v248 = vadd.f32 %v245, 1.0
  %v249 = vadd.f32 %v247, 1.0
  %v250 = vrcp.pop %v248
  %v251 = vmul.f32 1.0, %v250
  %v252 = vrcp.pop %v249
  %v253 = vmul.f32 1.0, %v252
  %v254 = vtanh.pop %v241
  %v255 = vmul.f32 %v251, 0.0
  %257 = vrot.lane.b32.xlu0 %v254, 64
  %v258 = vpop.permute.xlu0 %257
  %v260 = vmul.f32 %v251, %v258
  %262 = vrot.lane.b32.xlu0 %v260, 64
  %v263 = vpop.permute.xlu0 %262
  %v265 = vadd.f32 %v255, %v263
  %v266 = vtanh.pop %v265
  %268 = vrot.lane.b32.xlu0 %v266, 64
  %v269 = vpop.permute.xlu0 %268
  %v271 = vmul.f32 %v253, %v269
  %v272 = vsel %vm29, %v271, 0.0
  %274 = vrot.lane.b32.xlu0 %v265, 64
  %v275 = vpop.permute.xlu0 %274
  %v277 = vsel %vm29, %v275, 0.0
  %278 = vst.msk [vmem:[#allocation2] sm:$0xff] %vm110, %v272
  %280 = vrot.lane.b32.xlu0 %v272, 64
  %v281 = vpop.permute.xlu0 %280
  %vm283 = vcmask 1048064
  %284 = vst.msk [vmem:[#allocation2 + $0x38] sm:$0xff] %vm283, %v281
  %v285 = vpack.c.bf16 %v272, %v272
  %v287 = vsel %vm110, %v285, 0
  %289 = vmatprep.subr.bf16.mxu0 0
  %290 = vmatpush1.bf16.msra.mxu0 0
  %291 = vmatprep.subr.bf16.mxu0 0
  %292 = vmatpush1.bf16.msra.mxu0 0
  %293 = vmatprep.subr.bf16.mxu0 0
  %294 = vmatpush1.bf16.msra.mxu0 0
  %295 = vmatprep.subr.bf16.mxu0 0
  %296 = vmatpush1.bf16.msra.mxu0 0
  %297 = vmatprep.subr.bf16.mxu0 %v96
  %298 = vmatpush1.bf16.msra.mxu0 %v95
  %299 = vmatprep.subr.bf16.mxu0 %v94
  %300 = vmatpush1.bf16.msra.mxu0 %v93
  %301 = vmatprep.subr.bf16.mxu0 %v92
  %302 = vmatpush1.bf16.msra.mxu0 %v91
  %303 = vmatprep.subr.bf16.mxu0 %v90
  %304 = vmatpush1.bf16.msra.mxu0 %v89
  %305 = vmatprep.subr.bf16.mxu0 0
  %306 = vmatpush2.bf16.msra.mxu0 0
  %307 = vmatprep.subr.bf16.mxu0 0
  %308 = vmatpush2.bf16.msra.mxu0 0
  %309 = vmatprep.subr.bf16.mxu0 0
  %310 = vmatpush2.bf16.msra.mxu0 0
  %311 = vmatprep.subr.bf16.mxu0 0
  %312 = vmatpush2.bf16.msra.mxu0 0
  %313 = vmatprep.subr.bf16.mxu0 0
  %314 = vmatpush2.bf16.msra.mxu0 0
  %315 = vmatprep.subr.bf16.mxu0 0
  %316 = vmatpush2.bf16.msra.mxu0 0
  %317 = vmatprep.subr.bf16.mxu0 0
  %318 = vmatpush2.bf16.msra.mxu0 0
  %319 = vmatprep.subr.bf16.mxu0 0
  %320 = vmatpush2.bf16.msra.mxu0 0
  %321 = vmatprep.mubr.bf16.mxu0 0
  %322 = vmatmul.mubr.bf16.gmra.mxu0 %v287
  %v323 = vpop.f32.mrf.mxu0
  %v324 = vadd.f32 0.0, %v323
  %v325 = vpop.f32.mrf.mxu0
  %v326 = vadd.f32 0.0, %v325
  %v327 = vpop.f32.mrf.mxu0
  %v328 = vpop.f32.mrf.mxu0
  %329 = vdwg.mxu0
  %v330 = vadd.f32 %v162, %v324
  %v331 = vadd.f32 %v164, %v326
  %v332 = vxor.u32 %v330, 2147483648
  %v333 = vxor.u32 %v331, 2147483648
  %v334 = vmul.f32 %v332, 1.442695
  %v335 = vpow.pop %v334
  %v336 = vmul.f32 %v333, 1.442695
  %v337 = vpow.pop %v336
  %v338 = vadd.f32 %v335, 1.0
  %v339 = vadd.f32 %v337, 1.0
  %v340 = vrcp.pop %v338
  %v341 = vmul.f32 1.0, %v340
  %v342 = vrcp.pop %v339
  %v343 = vmul.f32 1.0, %v342
  %v344 = vtanh.pop %v331
  %346 = vrot.lane.b32.xlu0 %v277, 64
  %v347 = vpop.permute.xlu0 %346
  %v349 = vmul.f32 %v341, %v347
  %351 = vrot.lane.b32.xlu0 %v344, 64
  %v352 = vpop.permute.xlu0 %351
  %v354 = vmul.f32 %v341, %v352
  %356 = vrot.lane.b32.xlu0 %v354, 64
  %v357 = vpop.permute.xlu0 %356
  %v359 = vadd.f32 %v349, %v357
  %v360 = vtanh.pop %v359
  %362 = vrot.lane.b32.xlu0 %v360, 64
  %v363 = vpop.permute.xlu0 %362
  %v365 = vmul.f32 %v343, %v363
  %v366 = vsel %vm30, %v365, %v272
  %368 = vrot.lane.b32.xlu0 %v359, 64
  %v369 = vpop.permute.xlu0 %368
  %v371 = vsel %vm30, %v369, %v277
  %v372 = vsel %vm30, %v365, 0.0
  %373 = vst.msk [vmem:[#allocation2 + $0x8] sm:$0xff] %vm110, %v372
  %375 = vrot.lane.b32.xlu0 %v372, 64
  %v376 = vpop.permute.xlu0 %375
  %378 = vst.msk [vmem:[#allocation2 + $0x30] sm:$0xff] %vm283, %v376
  %v379 = vpack.c.bf16 %v366, %v366
  %v381 = vsel %vm110, %v379, 0
  %383 = vmatprep.subr.bf16.mxu0 0
  %384 = vmatpush1.bf16.msra.mxu0 0
  %385 = vmatprep.subr.bf16.mxu0 0
  %386 = vmatpush1.bf16.msra.mxu0 0
  %387 = vmatprep.subr.bf16.mxu0 0
  %388 = vmatpush1.bf16.msra.mxu0 0
  %389 = vmatprep.subr.bf16.mxu0 0
  %390 = vmatpush1.bf16.msra.mxu0 0
  %391 = vmatprep.subr.bf16.mxu0 %v96
  %392 = vmatpush1.bf16.msra.mxu0 %v95
  %393 = vmatprep.subr.bf16.mxu0 %v94
  %394 = vmatpush1.bf16.msra.mxu0 %v93
  %395 = vmatprep.subr.bf16.mxu0 %v92
  %396 = vmatpush1.bf16.msra.mxu0 %v91
  %397 = vmatprep.subr.bf16.mxu0 %v90
  %398 = vmatpush1.bf16.msra.mxu0 %v89
  %399 = vmatprep.subr.bf16.mxu0 0
  %400 = vmatpush2.bf16.msra.mxu0 0
  %401 = vmatprep.subr.bf16.mxu0 0
  %402 = vmatpush2.bf16.msra.mxu0 0
  %403 = vmatprep.subr.bf16.mxu0 0
  %404 = vmatpush2.bf16.msra.mxu0 0
  %405 = vmatprep.subr.bf16.mxu0 0
  %406 = vmatpush2.bf16.msra.mxu0 0
  %407 = vmatprep.subr.bf16.mxu0 0
  %408 = vmatpush2.bf16.msra.mxu0 0
  %409 = vmatprep.subr.bf16.mxu0 0
  %410 = vmatpush2.bf16.msra.mxu0 0
  %411 = vmatprep.subr.bf16.mxu0 0
  %412 = vmatpush2.bf16.msra.mxu0 0
  %413 = vmatprep.subr.bf16.mxu0 0
  %414 = vmatpush2.bf16.msra.mxu0 0
  %415 = vmatprep.mubr.bf16.mxu0 0
  %416 = vmatmul.mubr.bf16.gmra.mxu0 %v381
  %v417 = vpop.f32.mrf.mxu0
  %v418 = vadd.f32 0.0, %v417
  %v419 = vpop.f32.mrf.mxu0
  %v420 = vadd.f32 0.0, %v419
  %v421 = vpop.f32.mrf.mxu0
  %v422 = vpop.f32.mrf.mxu0
  %423 = vdwg.mxu0
  %v424 = vadd.f32 %v168, %v418
  %v425 = vadd.f32 %v170, %v420
  %v426 = vxor.u32 %v424, 2147483648
  %v427 = vxor.u32 %v425, 2147483648
  %v428 = vmul.f32 %v426, 1.442695
  %v429 = vpow.pop %v428
  %v430 = vmul.f32 %v427, 1.442695
  %v431 = vpow.pop %v430
  %v432 = vadd.f32 %v429, 1.0
  %v433 = vadd.f32 %v431, 1.0
  %v434 = vrcp.pop %v432
  %v435 = vmul.f32 1.0, %v434
  %v436 = vrcp.pop %v433
  %v437 = vmul.f32 1.0, %v436
  %v438 = vtanh.pop %v425
  %440 = vrot.lane.b32.xlu0 %v371, 64
  %v441 = vpop.permute.xlu0 %440
  %v443 = vmul.f32 %v435, %v441
  %445 = vrot.lane.b32.xlu0 %v438, 64
  %v446 = vpop.permute.xlu0 %445
  %v448 = vmul.f32 %v435, %v446
  %450 = vrot.lane.b32.xlu0 %v448, 64
  %v451 = vpop.permute.xlu0 %450
  %v453 = vadd.f32 %v443, %v451
  %v454 = vtanh.pop %v453
  %456 = vrot.lane.b32.xlu0 %v454, 64
  %v457 = vpop.permute.xlu0 %456
  %v459 = vmul.f32 %v437, %v457
  %v460 = vsel %vm31, %v459, %v366
  %462 = vrot.lane.b32.xlu0 %v453, 64
  %v463 = vpop.permute.xlu0 %462
  %v465 = vsel %vm31, %v463, %v371
  %v466 = vsel %vm31, %v459, 0.0
  %467 = vst.msk [vmem:[#allocation2 + $0x10] sm:$0xff] %vm110, %v466
  %469 = vrot.lane.b32.xlu0 %v466, 64
  %v470 = vpop.permute.xlu0 %469
  %472 = vst.msk [vmem:[#allocation2 + $0x28] sm:$0xff] %vm283, %v470
  %v473 = vpack.c.bf16 %v460, %v460
  %v475 = vsel %vm110, %v473, 0
  %477 = vmatprep.subr.bf16.mxu0 0
  %478 = vmatpush1.bf16.msra.mxu0 0
  %479 = vmatprep.subr.bf16.mxu0 0
  %480 = vmatpush1.bf16.msra.mxu0 0
  %481 = vmatprep.subr.bf16.mxu0 0
  %482 = vmatpush1.bf16.msra.mxu0 0
  %483 = vmatprep.subr.bf16.mxu0 0
  %484 = vmatpush1.bf16.msra.mxu0 0
  %485 = vmatprep.subr.bf16.mxu0 %v96
  %486 = vmatpush1.bf16.msra.mxu0 %v95
  %487 = vmatprep.subr.bf16.mxu0 %v94
  %488 = vmatpush1.bf16.msra.mxu0 %v93
  %489 = vmatprep.subr.bf16.mxu0 %v92
  %490 = vmatpush1.bf16.msra.mxu0 %v91
  %491 = vmatprep.subr.bf16.mxu0 %v90
  %492 = vmatpush1.bf16.msra.mxu0 %v89
  %493 = vmatprep.subr.bf16.mxu0 0
  %494 = vmatpush2.bf16.msra.mxu0 0
  %495 = vmatprep.subr.bf16.mxu0 0
  %496 = vmatpush2.bf16.msra.mxu0 0
  %497 = vmatprep.subr.bf16.mxu0 0
  %498 = vmatpush2.bf16.msra.mxu0 0
  %499 = vmatprep.subr.bf16.mxu0 0
  %500 = vmatpush2.bf16.msra.mxu0 0
  %501 = vmatprep.subr.bf16.mxu0 0
  %502 = vmatpush2.bf16.msra.mxu0 0
  %503 = vmatprep.subr.bf16.mxu0 0
  %504 = vmatpush2.bf16.msra.mxu0 0
  %505 = vmatprep.subr.bf16.mxu0 0
  %506 = vmatpush2.bf16.msra.mxu0 0
  %507 = vmatprep.subr.bf16.mxu0 0
  %508 = vmatpush2.bf16.msra.mxu0 0
  %509 = vmatprep.mubr.bf16.mxu0 0
  %510 = vmatmul.mubr.bf16.gmra.mxu0 %v475
  %v511 = vpop.f32.mrf.mxu0
  %v512 = vadd.f32 0.0, %v511
  %v513 = vpop.f32.mrf.mxu0
  %v514 = vadd.f32 0.0, %v513
  %v515 = vpop.f32.mrf.mxu0
  %v516 = vpop.f32.mrf.mxu0
  %517 = vdwg.mxu0
  %v518 = vadd.f32 %v172, %v512
  %v519 = vadd.f32 %v174, %v514
  %v520 = vxor.u32 %v518, 2147483648
  %v521 = vxor.u32 %v519, 2147483648
  %v522 = vmul.f32 %v520, 1.442695
  %v523 = vpow.pop %v522
  %v524 = vmul.f32 %v521, 1.442695
  %v525 = vpow.pop %v524
  %v526 = vadd.f32 %v523, 1.0
  %v527 = vadd.f32 %v525, 1.0
  %v528 = vrcp.pop %v526
  %v529 = vmul.f32 1.0, %v528
  %v530 = vrcp.pop %v527
  %v531 = vmul.f32 1.0, %v530
  %v532 = vtanh.pop %v519
  %534 = vrot.lane.b32.xlu0 %v465, 64
  %v535 = vpop.permute.xlu0 %534
  %v537 = vmul.f32 %v529, %v535
  %539 = vrot.lane.b32.xlu0 %v532, 64
  %v540 = vpop.permute.xlu0 %539
  %v542 = vmul.f32 %v529, %v540
  %544 = vrot.lane.b32.xlu0 %v542, 64
  %v545 = vpop.permute.xlu0 %544
  %v547 = vadd.f32 %v537, %v545
  %v548 = vtanh.pop %v547
  %550 = vrot.lane.b32.xlu0 %v548, 64
  %v551 = vpop.permute.xlu0 %550
  %v553 = vmul.f32 %v531, %v551
  %v554 = vsel %vm32, %v553, %v460
  %556 = vrot.lane.b32.xlu0 %v547, 64
  %v557 = vpop.permute.xlu0 %556
  %v559 = vsel %vm32, %v557, %v465
  %v560 = vsel %vm32, %v553, 0.0
  %561 = vst.msk [vmem:[#allocation2 + $0x18] sm:$0xff] %vm110, %v560
  %563 = vrot.lane.b32.xlu0 %v560, 64
  %v564 = vpop.permute.xlu0 %563
  %566 = vst.msk [vmem:[#allocation2 + $0x20] sm:$0xff] %vm283, %v564
  %v567 = vpack.c.bf16 %v554, %v554
  %v569 = vsel %vm110, %v567, 0
  %571 = vmatprep.subr.bf16.mxu0 0
  %572 = vmatpush1.bf16.msra.mxu0 0
  %573 = vmatprep.subr.bf16.mxu0 0
  %574 = vmatpush1.bf16.msra.mxu0 0
  %575 = vmatprep.subr.bf16.mxu0 0
  %576 = vmatpush1.bf16.msra.mxu0 0
  %577 = vmatprep.subr.bf16.mxu0 0
  %578 = vmatpush1.bf16.msra.mxu0 0
  %579 = vmatprep.subr.bf16.mxu0 %v96
  %580 = vmatpush1.bf16.msra.mxu0 %v95
  %581 = vmatprep.subr.bf16.mxu0 %v94
  %582 = vmatpush1.bf16.msra.mxu0 %v93
  %583 = vmatprep.subr.bf16.mxu0 %v92
  %584 = vmatpush1.bf16.msra.mxu0 %v91
  %585 = vmatprep.subr.bf16.mxu0 %v90
  %586 = vmatpush1.bf16.msra.mxu0 %v89
  %587 = vmatprep.subr.bf16.mxu0 0
  %588 = vmatpush2.bf16.msra.mxu0 0
  %589 = vmatprep.subr.bf16.mxu0 0
  %590 = vmatpush2.bf16.msra.mxu0 0
  %591 = vmatprep.subr.bf16.mxu0 0
  %592 = vmatpush2.bf16.msra.mxu0 0
  %593 = vmatprep.subr.bf16.mxu0 0
  %594 = vmatpush2.bf16.msra.mxu0 0
  %595 = vmatprep.subr.bf16.mxu0 0
  %596 = vmatpush2.bf16.msra.mxu0 0
  %597 = vmatprep.subr.bf16.mxu0 0
  %598 = vmatpush2.bf16.msra.mxu0 0
  %599 = vmatprep.subr.bf16.mxu0 0
  %600 = vmatpush2.bf16.msra.mxu0 0
  %601 = vmatprep.subr.bf16.mxu0 0
  %602 = vmatpush2.bf16.msra.mxu0 0
  %603 = vmatprep.mubr.bf16.mxu0 0
  %604 = vmatmul.mubr.bf16.gmra.mxu0 %v569
  %v605 = vpop.f32.mrf.mxu0
  %v606 = vadd.f32 0.0, %v605
  %v607 = vpop.f32.mrf.mxu0
  %v608 = vadd.f32 0.0, %v607
  %v609 = vpop.f32.mrf.mxu0
  %v610 = vpop.f32.mrf.mxu0
  %611 = vdwg.mxu0
  %v612 = vadd.f32 %v178, %v606
  %v613 = vadd.f32 %v180, %v608
  %v614 = vxor.u32 %v612, 2147483648
  %v615 = vxor.u32 %v613, 2147483648
  %v616 = vmul.f32 %v614, 1.442695
  %v617 = vpow.pop %v616
  %v618 = vmul.f32 %v615, 1.442695
  %v619 = vpow.pop %v618
  %v620 = vadd.f32 %v617, 1.0
  %v621 = vadd.f32 %v619, 1.0
  %v622 = vrcp.pop %v620
  %v623 = vmul.f32 1.0, %v622
  %v624 = vrcp.pop %v621
  %v625 = vmul.f32 1.0, %v624
  %v626 = vtanh.pop %v613
  %628 = vrot.lane.b32.xlu0 %v559, 64
  %v629 = vpop.permute.xlu0 %628
  %v631 = vmul.f32 %v623, %v629
  %633 = vrot.lane.b32.xlu0 %v626, 64
  %v634 = vpop.permute.xlu0 %633
  %v636 = vmul.f32 %v623, %v634
  %638 = vrot.lane.b32.xlu0 %v636, 64
  %v639 = vpop.permute.xlu0 %638
  %v641 = vadd.f32 %v631, %v639
  %v642 = vtanh.pop %v641
  %644 = vrot.lane.b32.xlu0 %v642, 64
  %v645 = vpop.permute.xlu0 %644
  %v647 = vmul.f32 %v625, %v645
  %v648 = vsel %vm33, %v647, %v554
  %650 = vrot.lane.b32.xlu0 %v641, 64
  %v651 = vpop.permute.xlu0 %650
  %v653 = vsel %vm33, %v651, %v559
  %v654 = vsel %vm33, %v647, 0.0
  %655 = vst.msk [vmem:[#allocation2 + $0x20] sm:$0xff] %vm110, %v654
  %657 = vrot.lane.b32.xlu0 %v654, 64
  %v658 = vpop.permute.xlu0 %657
  %660 = vst.msk [vmem:[#allocation2 + $0x18] sm:$0xff] %vm283, %v658
  %v661 = vpack.c.bf16 %v648, %v648
  %v663 = vsel %vm110, %v661, 0
  %665 = vmatprep.subr.bf16.mxu0 0
  %666 = vmatpush1.bf16.msra.mxu0 0
  %667 = vmatprep.subr.bf16.mxu0 0
  %668 = vmatpush1.bf16.msra.mxu0 0
  %669 = vmatprep.subr.bf16.mxu0 0
  %670 = vmatpush1.bf16.msra.mxu0 0
  %671 = vmatprep.subr.bf16.mxu0 0
  %672 = vmatpush1.bf16.msra.mxu0 0
  %673 = vmatprep.subr.bf16.mxu0 %v96
  %674 = vmatpush1.bf16.msra.mxu0 %v95
  %675 = vmatprep.subr.bf16.mxu0 %v94
  %676 = vmatpush1.bf16.msra.mxu0 %v93
  %677 = vmatprep.subr.bf16.mxu0 %v92
  %678 = vmatpush1.bf16.msra.mxu0 %v91
  %679 = vmatprep.subr.bf16.mxu0 %v90
  %680 = vmatpush1.bf16.msra.mxu0 %v89
  %681 = vmatprep.subr.bf16.mxu0 0
  %682 = vmatpush2.bf16.msra.mxu0 0
  %683 = vmatprep.subr.bf16.mxu0 0
  %684 = vmatpush2.bf16.msra.mxu0 0
  %685 = vmatprep.subr.bf16.mxu0 0
  %686 = vmatpush2.bf16.msra.mxu0 0
  %687 = vmatprep.subr.bf16.mxu0 0
  %688 = vmatpush2.bf16.msra.mxu0 0
  %689 = vmatprep.subr.bf16.mxu0 0
  %690 = vmatpush2.bf16.msra.mxu0 0
  %691 = vmatprep.subr.bf16.mxu0 0
  %692 = vmatpush2.bf16.msra.mxu0 0
  %693 = vmatprep.subr.bf16.mxu0 0
  %694 = vmatpush2.bf16.msra.mxu0 0
  %695 = vmatprep.subr.bf16.mxu0 0
  %696 = vmatpush2.bf16.msra.mxu0 0
  %697 = vmatprep.mubr.bf16.mxu0 0
  %698 = vmatmul.mubr.bf16.gmra.mxu0 %v663
  %v699 = vpop.f32.mrf.mxu0
  %v700 = vadd.f32 0.0, %v699
  %v701 = vpop.f32.mrf.mxu0
  %v702 = vadd.f32 0.0, %v701
  %v703 = vpop.f32.mrf.mxu0
  %v704 = vpop.f32.mrf.mxu0
  %705 = vdwg.mxu0
  %v706 = vadd.f32 %v182, %v700
  %v707 = vadd.f32 %v184, %v702
  %v708 = vxor.u32 %v706, 2147483648
  %v709 = vxor.u32 %v707, 2147483648
  %v710 = vmul.f32 %v708, 1.442695
  %v711 = vpow.pop %v710
  %v712 = vmul.f32 %v709, 1.442695
  %v713 = vpow.pop %v712
  %v714 = vadd.f32 %v711, 1.0
  %v715 = vadd.f32 %v713, 1.0
  %v716 = vrcp.pop %v714
  %v717 = vmul.f32 1.0, %v716
  %v718 = vrcp.pop %v715
  %v719 = vmul.f32 1.0, %v718
  %v720 = vtanh.pop %v707
  %722 = vrot.lane.b32.xlu0 %v653, 64
  %v723 = vpop.permute.xlu0 %722
  %v725 = vmul.f32 %v717, %v723
  %727 = vrot.lane.b32.xlu0 %v720, 64
  %v728 = vpop.permute.xlu0 %727
  %v730 = vmul.f32 %v717, %v728
  %732 = vrot.lane.b32.xlu0 %v730, 64
  %v733 = vpop.permute.xlu0 %732
  %v735 = vadd.f32 %v725, %v733
  %v736 = vtanh.pop %v735
  %738 = vrot.lane.b32.xlu0 %v736, 64
  %v739 = vpop.permute.xlu0 %738
  %v741 = vmul.f32 %v719, %v739
  %v742 = vsel %vm34, %v741, %v648
  %744 = vrot.lane.b32.xlu0 %v735, 64
  %v745 = vpop.permute.xlu0 %744
  %v747 = vsel %vm34, %v745, %v653
  %v748 = vsel %vm34, %v741, 0.0
  %749 = vst.msk [vmem:[#allocation2 + $0x28] sm:$0xff] %vm110, %v748
  %751 = vrot.lane.b32.xlu0 %v748, 64
  %v752 = vpop.permute.xlu0 %751
  %754 = vst.msk [vmem:[#allocation2 + $0x10] sm:$0xff] %vm283, %v752
  %v755 = vpack.c.bf16 %v742, %v742
  %v757 = vsel %vm110, %v755, 0
  %759 = vmatprep.subr.bf16.mxu0 0
  %760 = vmatpush1.bf16.msra.mxu0 0
  %761 = vmatprep.subr.bf16.mxu0 0
  %762 = vmatpush1.bf16.msra.mxu0 0
  %763 = vmatprep.subr.bf16.mxu0 0
  %764 = vmatpush1.bf16.msra.mxu0 0
  %765 = vmatprep.subr.bf16.mxu0 0
  %766 = vmatpush1.bf16.msra.mxu0 0
  %767 = vmatprep.subr.bf16.mxu0 %v96
  %768 = vmatpush1.bf16.msra.mxu0 %v95
  %769 = vmatprep.subr.bf16.mxu0 %v94
  %770 = vmatpush1.bf16.msra.mxu0 %v93
  %771 = vmatprep.subr.bf16.mxu0 %v92
  %772 = vmatpush1.bf16.msra.mxu0 %v91
  %773 = vmatprep.subr.bf16.mxu0 %v90
  %774 = vmatpush1.bf16.msra.mxu0 %v89
  %775 = vmatprep.subr.bf16.mxu0 0
  %776 = vmatpush2.bf16.msra.mxu0 0
  %777 = vmatprep.subr.bf16.mxu0 0
  %778 = vmatpush2.bf16.msra.mxu0 0
  %779 = vmatprep.subr.bf16.mxu0 0
  %780 = vmatpush2.bf16.msra.mxu0 0
  %781 = vmatprep.subr.bf16.mxu0 0
  %782 = vmatpush2.bf16.msra.mxu0 0
  %783 = vmatprep.subr.bf16.mxu0 0
  %784 = vmatpush2.bf16.msra.mxu0 0
  %785 = vmatprep.subr.bf16.mxu0 0
  %786 = vmatpush2.bf16.msra.mxu0 0
  %787 = vmatprep.subr.bf16.mxu0 0
  %788 = vmatpush2.bf16.msra.mxu0 0
  %789 = vmatprep.subr.bf16.mxu0 0
  %790 = vmatpush2.bf16.msra.mxu0 0
  %791 = vmatprep.mubr.bf16.mxu0 0
  %792 = vmatmul.mubr.bf16.gmra.mxu0 %v757
  %v793 = vpop.f32.mrf.mxu0
  %v794 = vadd.f32 0.0, %v793
  %v795 = vpop.f32.mrf.mxu0
  %v796 = vadd.f32 0.0, %v795
  %v797 = vpop.f32.mrf.mxu0
  %v798 = vpop.f32.mrf.mxu0
  %799 = vdwg.mxu0
  %v800 = vadd.f32 %v188, %v794
  %v801 = vadd.f32 %v190, %v796
  %v802 = vxor.u32 %v800, 2147483648
  %v803 = vxor.u32 %v801, 2147483648
  %v804 = vmul.f32 %v802, 1.442695
  %v805 = vpow.pop %v804
  %v806 = vmul.f32 %v803, 1.442695
  %v807 = vpow.pop %v806
  %v808 = vadd.f32 %v805, 1.0
  %v809 = vadd.f32 %v807, 1.0
  %v810 = vrcp.pop %v808
  %v811 = vmul.f32 1.0, %v810
  %v812 = vrcp.pop %v809
  %v813 = vmul.f32 1.0, %v812
  %v814 = vtanh.pop %v801
  %816 = vrot.lane.b32.xlu0 %v747, 64
  %v817 = vpop.permute.xlu0 %816
  %v819 = vmul.f32 %v811, %v817
  %821 = vrot.lane.b32.xlu0 %v814, 64
  %v822 = vpop.permute.xlu0 %821
  %v824 = vmul.f32 %v811, %v822
  %826 = vrot.lane.b32.xlu0 %v824, 64
  %v827 = vpop.permute.xlu0 %826
  %v829 = vadd.f32 %v819, %v827
  %v830 = vtanh.pop %v829
  %832 = vrot.lane.b32.xlu0 %v830, 64
  %v833 = vpop.permute.xlu0 %832
  %v835 = vmul.f32 %v813, %v833
  %v836 = vsel %vm35, %v835, %v742
  %838 = vrot.lane.b32.xlu0 %v829, 64
  %v839 = vpop.permute.xlu0 %838
  %v841 = vsel %vm35, %v839, %v747
  %v842 = vsel %vm35, %v835, 0.0
  %843 = vst.msk [vmem:[#allocation2 + $0x30] sm:$0xff] %vm110, %v842
  %845 = vrot.lane.b32.xlu0 %v842, 64
  %v846 = vpop.permute.xlu0 %845
  %848 = vst.msk [vmem:[#allocation2 + $0x8] sm:$0xff] %vm283, %v846
  %v849 = vpack.c.bf16 %v836, %v836
  %v851 = vsel %vm110, %v849, 0
  %853 = vmatprep.subr.bf16.mxu0 0
  %854 = vmatpush1.bf16.msra.mxu0 0
  %855 = vmatprep.subr.bf16.mxu0 0
  %856 = vmatpush1.bf16.msra.mxu0 0
  %857 = vmatprep.subr.bf16.mxu0 0
  %858 = vmatpush1.bf16.msra.mxu0 0
  %859 = vmatprep.subr.bf16.mxu0 0
  %860 = vmatpush1.bf16.msra.mxu0 0
  %861 = vmatprep.subr.bf16.mxu0 %v96
  %862 = vmatpush1.bf16.msra.mxu0 %v95
  %863 = vmatprep.subr.bf16.mxu0 %v94
  %864 = vmatpush1.bf16.msra.mxu0 %v93
  %865 = vmatprep.subr.bf16.mxu0 %v92
  %866 = vmatpush1.bf16.msra.mxu0 %v91
  %867 = vmatprep.subr.bf16.mxu0 %v90
  %868 = vmatpush1.bf16.msra.mxu0 %v89
  %869 = vmatprep.subr.bf16.mxu0 0
  %870 = vmatpush2.bf16.msra.mxu0 0
  %871 = vmatprep.subr.bf16.mxu0 0
  %872 = vmatpush2.bf16.msra.mxu0 0
  %873 = vmatprep.subr.bf16.mxu0 0
  %874 = vmatpush2.bf16.msra.mxu0 0
  %875 = vmatprep.subr.bf16.mxu0 0
  %876 = vmatpush2.bf16.msra.mxu0 0
  %877 = vmatprep.subr.bf16.mxu0 0
  %878 = vmatpush2.bf16.msra.mxu0 0
  %879 = vmatprep.subr.bf16.mxu0 0
  %880 = vmatpush2.bf16.msra.mxu0 0
  %881 = vmatprep.subr.bf16.mxu0 0
  %882 = vmatpush2.bf16.msra.mxu0 0
  %883 = vmatprep.subr.bf16.mxu0 0
  %884 = vmatpush2.bf16.msra.mxu0 0
  %885 = vmatprep.mubr.bf16.mxu0 0
  %886 = vmatmul.mubr.bf16.gmra.mxu0 %v851
  %v887 = vpop.f32.mrf.mxu0
  %v888 = vadd.f32 0.0, %v887
  %v889 = vpop.f32.mrf.mxu0
  %v890 = vadd.f32 0.0, %v889
  %v891 = vpop.f32.mrf.mxu0
  %v892 = vpop.f32.mrf.mxu0
  %893 = vdwg.mxu0
  %v894 = vadd.f32 %v192, %v888
  %v895 = vadd.f32 %v194, %v890
  %v896 = vxor.u32 %v894, 2147483648
  %v897 = vxor.u32 %v895, 2147483648
  %v898 = vmul.f32 %v896, 1.442695
  %v899 = vpow.pop %v898
  %v900 = vmul.f32 %v897, 1.442695
  %v901 = vpow.pop %v900
  %v902 = vadd.f32 %v899, 1.0
  %v903 = vadd.f32 %v901, 1.0
  %v904 = vrcp.pop %v902
  %v905 = vmul.f32 1.0, %v904
  %v906 = vrcp.pop %v903
  %v907 = vmul.f32 1.0, %v906
  %v908 = vtanh.pop %v895
  %910 = vrot.lane.b32.xlu0 %v841, 64
  %v911 = vpop.permute.xlu0 %910
  %v913 = vmul.f32 %v905, %v911
  %915 = vrot.lane.b32.xlu0 %v908, 64
  %v916 = vpop.permute.xlu0 %915
  %v918 = vmul.f32 %v905, %v916
  %920 = vrot.lane.b32.xlu0 %v918, 64
  %v921 = vpop.permute.xlu0 %920
  %v923 = vadd.f32 %v913, %v921
  %v924 = vtanh.pop %v923
  %926 = vrot.lane.b32.xlu0 %v924, 64
  %v927 = vpop.permute.xlu0 %926
  %v929 = vmul.f32 %v907, %v927
  %v930 = vsel %vm36, %v929, 0.0
  %931 = vst.msk [vmem:[#allocation2 + $0x38] sm:$0xff] %vm110, %v930
  %933 = vrot.lane.b32.xlu0 %v930, 64
  %v934 = vpop.permute.xlu0 %933
  %936 = vst.msk [vmem:[#allocation2] sm:$0xff] %vm283, %v934
  %v937 = vld [vmem:[#allocation2] sm:$0xff]
  %v938 = vld [vmem:[#allocation2 + $0x8] sm:$0xff]
  %v939 = vld [vmem:[#allocation2 + $0x10] sm:$0xff]
  %v940 = vld [vmem:[#allocation2 + $0x18] sm:$0xff]
  %v941 = vld [vmem:[#allocation2 + $0x20] sm:$0xff]
  %v942 = vld [vmem:[#allocation2 + $0x28] sm:$0xff]
  %v943 = vld [vmem:[#allocation2 + $0x30] sm:$0xff]
  %v944 = vld [vmem:[#allocation2 + $0x38] sm:$0xff]
  %v945 = vpack.c.bf16 %v938, %v937
  %v946 = vpack.c.bf16 %v940, %v939
  %v947 = vpack.c.bf16 %v942, %v941
  %v948 = vpack.c.bf16 %v944, %v943
  %v949 = vld [vmem:[%s3] sm:$0xff]
  %v950 = vld [vmem:[%s3 + $0x8] sm:$0xff]
  %v951 = vld [vmem:[%s3 + $0x10] sm:$0xff]
  %v952 = vld [vmem:[%s3 + $0x18] sm:$0xff]
  %v953 = vld [vmem:[%s3 + $0x20] sm:$0xff]
  %v954 = vld [vmem:[%s3 + $0x28] sm:$0xff]
  %v955 = vld [vmem:[%s3 + $0x30] sm:$0xff]
  %v956 = vld [vmem:[%s3 + $0x38] sm:$0xff]
  %v957 = vld [vmem:[%s3 + $0x40] sm:$0xff]
  %v958 = vld [vmem:[%s3 + $0x48] sm:$0xff]
  %v959 = vld [vmem:[%s3 + $0x50] sm:$0xff]
  %v960 = vld [vmem:[%s3 + $0x58] sm:$0xff]
  %v961 = vld [vmem:[%s3 + $0x60] sm:$0xff]
  %v962 = vld [vmem:[%s3 + $0x68] sm:$0xff]
  %v963 = vld [vmem:[%s3 + $0x70] sm:$0xff]
  %v964 = vld [vmem:[%s3 + $0x78] sm:$0xff]
  %v965 = vld [vmem:[%s3 + $0x80] sm:$0xff]
  %v966 = vld [vmem:[%s3 + $0x88] sm:$0xff]
  %v967 = vld [vmem:[%s3 + $0x90] sm:$0xff]
  %v968 = vld [vmem:[%s3 + $0x98] sm:$0xff]
  %v969 = vld [vmem:[%s3 + $0xa0] sm:$0xff]
  %v970 = vld [vmem:[%s3 + $0xa8] sm:$0xff]
  %v971 = vld [vmem:[%s3 + $0xb0] sm:$0xff]
  %v972 = vld [vmem:[%s3 + $0xb8] sm:$0xff]
  %v973 = vld [vmem:[%s3 + $0xc0] sm:$0xff]
  %v974 = vld [vmem:[%s3 + $0xc8] sm:$0xff]
  %v975 = vld [vmem:[%s3 + $0xd0] sm:$0xff]
  %v976 = vld [vmem:[%s3 + $0xd8] sm:$0xff]
  %v977 = vld [vmem:[%s3 + $0xe0] sm:$0xff]
  %v978 = vld [vmem:[%s3 + $0xe8] sm:$0xff]
  %v979 = vld [vmem:[%s3 + $0xf0] sm:$0xff]
  %v980 = vld [vmem:[%s3 + $0xf8] sm:$0xff]
  %v981 = vpack.c.bf16 %v951, %v949
  %v982 = vpack.c.bf16 %v952, %v950
  %v983 = vpack.c.bf16 %v955, %v953
  %v984 = vpack.c.bf16 %v956, %v954
  %v985 = vpack.c.bf16 %v959, %v957
  %v986 = vpack.c.bf16 %v960, %v958
  %v987 = vpack.c.bf16 %v963, %v961
  %v988 = vpack.c.bf16 %v964, %v962
  %v989 = vpack.c.bf16 %v967, %v965
  %v990 = vpack.c.bf16 %v968, %v966
  %v991 = vpack.c.bf16 %v971, %v969
  %v992 = vpack.c.bf16 %v972, %v970
  %v993 = vpack.c.bf16 %v975, %v973
  %v994 = vpack.c.bf16 %v976, %v974
  %v995 = vpack.c.bf16 %v979, %v977
  %v996 = vpack.c.bf16 %v980, %v978
  %v997 = vld [vmem:[%s3 + $0x100] sm:$0xff]
  %v998 = vld [vmem:[%s3 + $0x108] sm:$0xff]
  %v999 = vld [vmem:[%s3 + $0x110] sm:$0xff]
  %v1000 = vld [vmem:[%s3 + $0x118] sm:$0xff]
  %v1001 = vld [vmem:[%s3 + $0x120] sm:$0xff]
  %v1002 = vld [vmem:[%s3 + $0x128] sm:$0xff]
  %v1003 = vld [vmem:[%s3 + $0x130] sm:$0xff]
  %v1004 = vld [vmem:[%s3 + $0x138] sm:$0xff]
  %v1005 = vld [vmem:[%s3 + $0x140] sm:$0xff]
  %v1006 = vld [vmem:[%s3 + $0x148] sm:$0xff]
  %v1007 = vld [vmem:[%s3 + $0x150] sm:$0xff]
  %v1008 = vld [vmem:[%s3 + $0x158] sm:$0xff]
  %v1009 = vld [vmem:[%s3 + $0x160] sm:$0xff]
  %v1010 = vld [vmem:[%s3 + $0x168] sm:$0xff]
  %v1011 = vld [vmem:[%s3 + $0x170] sm:$0xff]
  %v1012 = vld [vmem:[%s3 + $0x178] sm:$0xff]
  %v1013 = vpack.c.bf16 %v999, %v997
  %v1014 = vpack.c.bf16 %v1000, %v998
  %v1015 = vpack.c.bf16 %v1003, %v1001
  %v1016 = vpack.c.bf16 %v1004, %v1002
  %v1017 = vpack.c.bf16 %v1007, %v1005
  %v1018 = vpack.c.bf16 %v1008, %v1006
  %v1019 = vpack.c.bf16 %v1011, %v1009
  %v1020 = vpack.c.bf16 %v1012, %v1010
  %s1021 = scalar_lea.vmem %s3, 384
  %v1022 = vld [vmem:[%s1021] ss:$8 sm:$0x3]
  %v1024 = vlaneseq
  %v1025 = vshrl.u32 %v1024, 7
  %v1026 = vsub.s32 0, %v1025
  %v1027 = vrot.slane %v1022, %v1026
  %v1028 = vlaneseq
  %v1029 = vshrl.u32 %v1028, 7
  %v1030 = vsub.s32 1, %v1029
  %v1031 = vrot.slane %v1022, %v1030
  %1034 = vmatprep.subr.bf16.mxu0 %v996
  %1035 = vmatpush1.bf16.msra.mxu0 %v995
  %1036 = vmatprep.subr.bf16.mxu0 %v994
  %1037 = vmatpush1.bf16.msra.mxu0 %v993
  %1038 = vmatprep.subr.bf16.mxu0 %v992
  %1039 = vmatpush1.bf16.msra.mxu0 %v991
  %1040 = vmatprep.subr.bf16.mxu0 %v990
  %1041 = vmatpush1.bf16.msra.mxu0 %v989
  %1042 = vmatprep.subr.bf16.mxu0 %v988
  %1043 = vmatpush1.bf16.msra.mxu0 %v987
  %1044 = vmatprep.subr.bf16.mxu0 %v986
  %1045 = vmatpush1.bf16.msra.mxu0 %v985
  %1046 = vmatprep.subr.bf16.mxu0 %v984
  %1047 = vmatpush1.bf16.msra.mxu0 %v983
  %1048 = vmatprep.subr.bf16.mxu0 %v982
  %1049 = vmatpush1.bf16.msra.mxu0 %v981
  %1050 = vmatprep.subr.bf16.mxu0 0
  %1051 = vmatpush2.bf16.msra.mxu0 0
  %1052 = vmatprep.subr.bf16.mxu0 0
  %1053 = vmatpush2.bf16.msra.mxu0 0
  %1054 = vmatprep.subr.bf16.mxu0 0
  %1055 = vmatpush2.bf16.msra.mxu0 0
  %1056 = vmatprep.subr.bf16.mxu0 0
  %1057 = vmatpush2.bf16.msra.mxu0 0
  %1058 = vmatprep.subr.bf16.mxu0 0
  %1059 = vmatpush2.bf16.msra.mxu0 0
  %1060 = vmatprep.subr.bf16.mxu0 0
  %1061 = vmatpush2.bf16.msra.mxu0 0
  %1062 = vmatprep.subr.bf16.mxu0 0
  %1063 = vmatpush2.bf16.msra.mxu0 0
  %1064 = vmatprep.subr.bf16.mxu0 0
  %1065 = vmatpush2.bf16.msra.mxu0 0
  %1066 = vmatprep.mubr.bf16.mxu0 0
  %1067 = vmatmul.mubr.bf16.gmra.mxu0 %v945
  %v1068 = vpop.f32.mrf.mxu0
  %v1069 = vadd.f32 %v1027, %v1068
  %v1070 = vpop.f32.mrf.mxu0
  %v1071 = vadd.f32 %v1031, %v1070
  %v1072 = vpop.f32.mrf.mxu0
  %v1073 = vadd.f32 %v1027, %v1072
  %v1074 = vpop.f32.mrf.mxu0
  %v1075 = vadd.f32 %v1031, %v1074
  %1076 = vmatprep.mubr.bf16.mxu0 0
  %1077 = vmatmul.mubr.bf16.gmra.mxu0 %v946
  %v1078 = vpop.f32.mrf.mxu0
  %v1079 = vadd.f32 %v1027, %v1078
  %v1080 = vpop.f32.mrf.mxu0
  %v1081 = vadd.f32 %v1031, %v1080
  %v1082 = vpop.f32.mrf.mxu0
  %v1083 = vadd.f32 %v1027, %v1082
  %v1084 = vpop.f32.mrf.mxu0
  %v1085 = vadd.f32 %v1031, %v1084
  %1086 = vmatprep.mubr.bf16.mxu0 0
  %1087 = vmatmul.mubr.bf16.gmra.mxu0 %v947
  %v1088 = vpop.f32.mrf.mxu0
  %v1089 = vadd.f32 %v1027, %v1088
  %v1090 = vpop.f32.mrf.mxu0
  %v1091 = vadd.f32 %v1031, %v1090
  %v1092 = vpop.f32.mrf.mxu0
  %v1093 = vadd.f32 %v1027, %v1092
  %v1094 = vpop.f32.mrf.mxu0
  %v1095 = vadd.f32 %v1031, %v1094
  %1096 = vmatprep.mubr.bf16.mxu0 0
  %1097 = vmatmul.mubr.bf16.gmra.mxu0 %v948
  %v1098 = vpop.f32.mrf.mxu0
  %v1099 = vadd.f32 %v1027, %v1098
  %v1100 = vpop.f32.mrf.mxu0
  %v1101 = vadd.f32 %v1031, %v1100
  %v1102 = vpop.f32.mrf.mxu0
  %v1103 = vadd.f32 %v1027, %v1102
  %v1104 = vpop.f32.mrf.mxu0
  %v1105 = vadd.f32 %v1031, %v1104
  %1106 = vdwg.mxu0
  %1107 = vmatprep.subr.bf16.mxu0 0
  %1108 = vmatpush1.bf16.msra.mxu0 0
  %1109 = vmatprep.subr.bf16.mxu0 0
  %1110 = vmatpush1.bf16.msra.mxu0 0
  %1111 = vmatprep.subr.bf16.mxu0 0
  %1112 = vmatpush1.bf16.msra.mxu0 0
  %1113 = vmatprep.subr.bf16.mxu0 0
  %1114 = vmatpush1.bf16.msra.mxu0 0
  %1115 = vmatprep.subr.bf16.mxu0 %v1020
  %1116 = vmatpush1.bf16.msra.mxu0 %v1019
  %1117 = vmatprep.subr.bf16.mxu0 %v1018
  %1118 = vmatpush1.bf16.msra.mxu0 %v1017
  %1119 = vmatprep.subr.bf16.mxu0 %v1016
  %1120 = vmatpush1.bf16.msra.mxu0 %v1015
  %1121 = vmatprep.subr.bf16.mxu0 %v1014
  %1122 = vmatpush1.bf16.msra.mxu0 %v1013
  %1123 = vmatprep.subr.bf16.mxu0 0
  %1124 = vmatpush2.bf16.msra.mxu0 0
  %1125 = vmatprep.subr.bf16.mxu0 0
  %1126 = vmatpush2.bf16.msra.mxu0 0
  %1127 = vmatprep.subr.bf16.mxu0 0
  %1128 = vmatpush2.bf16.msra.mxu0 0
  %1129 = vmatprep.subr.bf16.mxu0 0
  %1130 = vmatpush2.bf16.msra.mxu0 0
  %1131 = vmatprep.subr.bf16.mxu0 0
  %1132 = vmatpush2.bf16.msra.mxu0 0
  %1133 = vmatprep.subr.bf16.mxu0 0
  %1134 = vmatpush2.bf16.msra.mxu0 0
  %1135 = vmatprep.subr.bf16.mxu0 0
  %1136 = vmatpush2.bf16.msra.mxu0 0
  %1137 = vmatprep.subr.bf16.mxu0 0
  %1138 = vmatpush2.bf16.msra.mxu0 0
  %1139 = vmatprep.mubr.bf16.mxu0 0
  %1140 = vmatmul.mubr.bf16.gmra.mxu0 %v197
  %v1141 = vpop.f32.mrf.mxu0
  %v1142 = vadd.f32 0.0, %v1141
  %v1143 = vpop.f32.mrf.mxu0
  %v1144 = vadd.f32 0.0, %v1143
  %v1145 = vpop.f32.mrf.mxu0
  %v1146 = vpop.f32.mrf.mxu0
  %1147 = vdwg.mxu0
  %v1148 = vadd.f32 %v1069, %v1142
  %v1149 = vadd.f32 %v1071, %v1144
  %v1150 = vxor.u32 %v1148, 2147483648
  %v1151 = vxor.u32 %v1149, 2147483648
  %v1152 = vmul.f32 %v1150, 1.442695
  %v1153 = vpow.pop %v1152
  %v1154 = vmul.f32 %v1151, 1.442695
  %v1155 = vpow.pop %v1154
  %v1156 = vadd.f32 %v1153, 1.0
  %v1157 = vadd.f32 %v1155, 1.0
  %v1158 = vrcp.pop %v1156
  %v1159 = vmul.f32 1.0, %v1158
  %v1160 = vrcp.pop %v1157
  %v1161 = vmul.f32 1.0, %v1160
  %v1162 = vtanh.pop %v1149
  %v1163 = vmul.f32 %v1159, 0.0
  %1165 = vrot.lane.b32.xlu0 %v1162, 64
  %v1166 = vpop.permute.xlu0 %1165
  %v1168 = vmul.f32 %v1159, %v1166
  %1170 = vrot.lane.b32.xlu0 %v1168, 64
  %v1171 = vpop.permute.xlu0 %1170
  %v1173 = vadd.f32 %v1163, %v1171
  %v1174 = vtanh.pop %v1173
  %1176 = vrot.lane.b32.xlu0 %v1174, 64
  %v1177 = vpop.permute.xlu0 %1176
  %v1179 = vmul.f32 %v1161, %v1177
  %v1180 = vsel %vm29, %v1179, 0.0
  %1182 = vrot.lane.b32.xlu0 %v1173, 64
  %v1183 = vpop.permute.xlu0 %1182
  %v1185 = vsel %vm29, %v1183, 0.0
  %v1186 = vpack.c.bf16 %v1180, %v1180
  %v1188 = vsel %vm110, %v1186, 0
  %1190 = vmatprep.subr.bf16.mxu0 0
  %1191 = vmatpush1.bf16.msra.mxu0 0
  %1192 = vmatprep.subr.bf16.mxu0 0
  %1193 = vmatpush1.bf16.msra.mxu0 0
  %1194 = vmatprep.subr.bf16.mxu0 0
  %1195 = vmatpush1.bf16.msra.mxu0 0
  %1196 = vmatprep.subr.bf16.mxu0 0
  %1197 = vmatpush1.bf16.msra.mxu0 0
  %1198 = vmatprep.subr.bf16.mxu0 %v1020
  %1199 = vmatpush1.bf16.msra.mxu0 %v1019
  %1200 = vmatprep.subr.bf16.mxu0 %v1018
  %1201 = vmatpush1.bf16.msra.mxu0 %v1017
  %1202 = vmatprep.subr.bf16.mxu0 %v1016
  %1203 = vmatpush1.bf16.msra.mxu0 %v1015
  %1204 = vmatprep.subr.bf16.mxu0 %v1014
  %1205 = vmatpush1.bf16.msra.mxu0 %v1013
  %1206 = vmatprep.subr.bf16.mxu0 0
  %1207 = vmatpush2.bf16.msra.mxu0 0
  %1208 = vmatprep.subr.bf16.mxu0 0
  %1209 = vmatpush2.bf16.msra.mxu0 0
  %1210 = vmatprep.subr.bf16.mxu0 0
  %1211 = vmatpush2.bf16.msra.mxu0 0
  %1212 = vmatprep.subr.bf16.mxu0 0
  %1213 = vmatpush2.bf16.msra.mxu0 0
  %1214 = vmatprep.subr.bf16.mxu0 0
  %1215 = vmatpush2.bf16.msra.mxu0 0
  %1216 = vmatprep.subr.bf16.mxu0 0
  %1217 = vmatpush2.bf16.msra.mxu0 0
  %1218 = vmatprep.subr.bf16.mxu0 0
  %1219 = vmatpush2.bf16.msra.mxu0 0
  %1220 = vmatprep.subr.bf16.mxu0 0
  %1221 = vmatpush2.bf16.msra.mxu0 0
  %1222 = vmatprep.mubr.bf16.mxu0 0
  %1223 = vmatmul.mubr.bf16.gmra.mxu0 %v1188
  %v1224 = vpop.f32.mrf.mxu0
  %v1225 = vadd.f32 0.0, %v1224
  %v1226 = vpop.f32.mrf.mxu0
  %v1227 = vadd.f32 0.0, %v1226
  %v1228 = vpop.f32.mrf.mxu0
  %v1229 = vpop.f32.mrf.mxu0
  %1230 = vdwg.mxu0
  %v1231 = vadd.f32 %v1073, %v1225
  %v1232 = vadd.f32 %v1075, %v1227
  %v1233 = vxor.u32 %v1231, 2147483648
  %v1234 = vxor.u32 %v1232, 2147483648
  %v1235 = vmul.f32 %v1233, 1.442695
  %v1236 = vpow.pop %v1235
  %v1237 = vmul.f32 %v1234, 1.442695
  %v1238 = vpow.pop %v1237
  %v1239 = vadd.f32 %v1236, 1.0
  %v1240 = vadd.f32 %v1238, 1.0
  %v1241 = vrcp.pop %v1239
  %v1242 = vmul.f32 1.0, %v1241
  %v1243 = vrcp.pop %v1240
  %v1244 = vmul.f32 1.0, %v1243
  %v1245 = vtanh.pop %v1232
  %1247 = vrot.lane.b32.xlu0 %v1185, 64
  %v1248 = vpop.permute.xlu0 %1247
  %v1250 = vmul.f32 %v1242, %v1248
  %1252 = vrot.lane.b32.xlu0 %v1245, 64
  %v1253 = vpop.permute.xlu0 %1252
  %v1255 = vmul.f32 %v1242, %v1253
  %1257 = vrot.lane.b32.xlu0 %v1255, 64
  %v1258 = vpop.permute.xlu0 %1257
  %v1260 = vadd.f32 %v1250, %v1258
  %v1261 = vtanh.pop %v1260
  %1263 = vrot.lane.b32.xlu0 %v1261, 64
  %v1264 = vpop.permute.xlu0 %1263
  %v1266 = vmul.f32 %v1244, %v1264
  %v1267 = vsel %vm30, %v1266, %v1180
  %1269 = vrot.lane.b32.xlu0 %v1260, 64
  %v1270 = vpop.permute.xlu0 %1269
  %v1272 = vsel %vm30, %v1270, %v1185
  %v1273 = vpack.c.bf16 %v1267, %v1267
  %v1275 = vsel %vm110, %v1273, 0
  %1277 = vmatprep.subr.bf16.mxu0 0
  %1278 = vmatpush1.bf16.msra.mxu0 0
  %1279 = vmatprep.subr.bf16.mxu0 0
  %1280 = vmatpush1.bf16.msra.mxu0 0
  %1281 = vmatprep.subr.bf16.mxu0 0
  %1282 = vmatpush1.bf16.msra.mxu0 0
  %1283 = vmatprep.subr.bf16.mxu0 0
  %1284 = vmatpush1.bf16.msra.mxu0 0
  %1285 = vmatprep.subr.bf16.mxu0 %v1020
  %1286 = vmatpush1.bf16.msra.mxu0 %v1019
  %1287 = vmatprep.subr.bf16.mxu0 %v1018
  %1288 = vmatpush1.bf16.msra.mxu0 %v1017
  %1289 = vmatprep.subr.bf16.mxu0 %v1016
  %1290 = vmatpush1.bf16.msra.mxu0 %v1015
  %1291 = vmatprep.subr.bf16.mxu0 %v1014
  %1292 = vmatpush1.bf16.msra.mxu0 %v1013
  %1293 = vmatprep.subr.bf16.mxu0 0
  %1294 = vmatpush2.bf16.msra.mxu0 0
  %1295 = vmatprep.subr.bf16.mxu0 0
  %1296 = vmatpush2.bf16.msra.mxu0 0
  %1297 = vmatprep.subr.bf16.mxu0 0
  %1298 = vmatpush2.bf16.msra.mxu0 0
  %1299 = vmatprep.subr.bf16.mxu0 0
  %1300 = vmatpush2.bf16.msra.mxu0 0
  %1301 = vmatprep.subr.bf16.mxu0 0
  %1302 = vmatpush2.bf16.msra.mxu0 0
  %1303 = vmatprep.subr.bf16.mxu0 0
  %1304 = vmatpush2.bf16.msra.mxu0 0
  %1305 = vmatprep.subr.bf16.mxu0 0
  %1306 = vmatpush2.bf16.msra.mxu0 0
  %1307 = vmatprep.subr.bf16.mxu0 0
  %1308 = vmatpush2.bf16.msra.mxu0 0
  %1309 = vmatprep.mubr.bf16.mxu0 0
  %1310 = vmatmul.mubr.bf16.gmra.mxu0 %v1275
  %v1311 = vpop.f32.mrf.mxu0
  %v1312 = vadd.f32 0.0, %v1311
  %v1313 = vpop.f32.mrf.mxu0
  %v1314 = vadd.f32 0.0, %v1313
  %v1315 = vpop.f32.mrf.mxu0
  %v1316 = vpop.f32.mrf.mxu0
  %1317 = vdwg.mxu0
  %v1318 = vadd.f32 %v1079, %v1312
  %v1319 = vadd.f32 %v1081, %v1314
  %v1320 = vxor.u32 %v1318, 2147483648
  %v1321 = vxor.u32 %v1319, 2147483648
  %v1322 = vmul.f32 %v1320, 1.442695
  %v1323 = vpow.pop %v1322
  %v1324 = vmul.f32 %v1321, 1.442695
  %v1325 = vpow.pop %v1324
  %v1326 = vadd.f32 %v1323, 1.0
  %v1327 = vadd.f32 %v1325, 1.0
  %v1328 = vrcp.pop %v1326
  %v1329 = vmul.f32 1.0, %v1328
  %v1330 = vrcp.pop %v1327
  %v1331 = vmul.f32 1.0, %v1330
  %v1332 = vtanh.pop %v1319
  %1334 = vrot.lane.b32.xlu0 %v1272, 64
  %v1335 = vpop.permute.xlu0 %1334
  %v1337 = vmul.f32 %v1329, %v1335
  %1339 = vrot.lane.b32.xlu0 %v1332, 64
  %v1340 = vpop.permute.xlu0 %1339
  %v1342 = vmul.f32 %v1329, %v1340
  %1344 = vrot.lane.b32.xlu0 %v1342, 64
  %v1345 = vpop.permute.xlu0 %1344
  %v1347 = vadd.f32 %v1337, %v1345
  %v1348 = vtanh.pop %v1347
  %1350 = vrot.lane.b32.xlu0 %v1348, 64
  %v1351 = vpop.permute.xlu0 %1350
  %v1353 = vmul.f32 %v1331, %v1351
  %v1354 = vsel %vm31, %v1353, %v1267
  %1356 = vrot.lane.b32.xlu0 %v1347, 64
  %v1357 = vpop.permute.xlu0 %1356
  %v1359 = vsel %vm31, %v1357, %v1272
  %v1360 = vpack.c.bf16 %v1354, %v1354
  %v1362 = vsel %vm110, %v1360, 0
  %1364 = vmatprep.subr.bf16.mxu0 0
  %1365 = vmatpush1.bf16.msra.mxu0 0
  %1366 = vmatprep.subr.bf16.mxu0 0
  %1367 = vmatpush1.bf16.msra.mxu0 0
  %1368 = vmatprep.subr.bf16.mxu0 0
  %1369 = vmatpush1.bf16.msra.mxu0 0
  %1370 = vmatprep.subr.bf16.mxu0 0
  %1371 = vmatpush1.bf16.msra.mxu0 0
  %1372 = vmatprep.subr.bf16.mxu0 %v1020
  %1373 = vmatpush1.bf16.msra.mxu0 %v1019
  %1374 = vmatprep.subr.bf16.mxu0 %v1018
  %1375 = vmatpush1.bf16.msra.mxu0 %v1017
  %1376 = vmatprep.subr.bf16.mxu0 %v1016
  %1377 = vmatpush1.bf16.msra.mxu0 %v1015
  %1378 = vmatprep.subr.bf16.mxu0 %v1014
  %1379 = vmatpush1.bf16.msra.mxu0 %v1013
  %1380 = vmatprep.subr.bf16.mxu0 0
  %1381 = vmatpush2.bf16.msra.mxu0 0
  %1382 = vmatprep.subr.bf16.mxu0 0
  %1383 = vmatpush2.bf16.msra.mxu0 0
  %1384 = vmatprep.subr.bf16.mxu0 0
  %1385 = vmatpush2.bf16.msra.mxu0 0
  %1386 = vmatprep.subr.bf16.mxu0 0
  %1387 = vmatpush2.bf16.msra.mxu0 0
  %1388 = vmatprep.subr.bf16.mxu0 0
  %1389 = vmatpush2.bf16.msra.mxu0 0
  %1390 = vmatprep.subr.bf16.mxu0 0
  %1391 = vmatpush2.bf16.msra.mxu0 0
  %1392 = vmatprep.subr.bf16.mxu0 0
  %1393 = vmatpush2.bf16.msra.mxu0 0
  %1394 = vmatprep.subr.bf16.mxu0 0
  %1395 = vmatpush2.bf16.msra.mxu0 0
  %1396 = vmatprep.mubr.bf16.mxu0 0
  %1397 = vmatmul.mubr.bf16.gmra.mxu0 %v1362
  %v1398 = vpop.f32.mrf.mxu0
  %v1399 = vadd.f32 0.0, %v1398
  %v1400 = vpop.f32.mrf.mxu0
  %v1401 = vadd.f32 0.0, %v1400
  %v1402 = vpop.f32.mrf.mxu0
  %v1403 = vpop.f32.mrf.mxu0
  %1404 = vdwg.mxu0
  %v1405 = vadd.f32 %v1083, %v1399
  %v1406 = vadd.f32 %v1085, %v1401
  %v1407 = vxor.u32 %v1405, 2147483648
  %v1408 = vxor.u32 %v1406, 2147483648
  %v1409 = vmul.f32 %v1407, 1.442695
  %v1410 = vpow.pop %v1409
  %v1411 = vmul.f32 %v1408, 1.442695
  %v1412 = vpow.pop %v1411
  %v1413 = vadd.f32 %v1410, 1.0
  %v1414 = vadd.f32 %v1412, 1.0
  %v1415 = vrcp.pop %v1413
  %v1416 = vmul.f32 1.0, %v1415
  %v1417 = vrcp.pop %v1414
  %v1418 = vmul.f32 1.0, %v1417
  %v1419 = vtanh.pop %v1406
  %1421 = vrot.lane.b32.xlu0 %v1359, 64
  %v1422 = vpop.permute.xlu0 %1421
  %v1424 = vmul.f32 %v1416, %v1422
  %1426 = vrot.lane.b32.xlu0 %v1419, 64
  %v1427 = vpop.permute.xlu0 %1426
  %v1429 = vmul.f32 %v1416, %v1427
  %1431 = vrot.lane.b32.xlu0 %v1429, 64
  %v1432 = vpop.permute.xlu0 %1431
  %v1434 = vadd.f32 %v1424, %v1432
  %v1435 = vtanh.pop %v1434
  %1437 = vrot.lane.b32.xlu0 %v1435, 64
  %v1438 = vpop.permute.xlu0 %1437
  %v1440 = vmul.f32 %v1418, %v1438
  %v1441 = vsel %vm32, %v1440, %v1354
  %1443 = vrot.lane.b32.xlu0 %v1434, 64
  %v1444 = vpop.permute.xlu0 %1443
  %v1446 = vsel %vm32, %v1444, %v1359
  %v1447 = vpack.c.bf16 %v1441, %v1441
  %v1449 = vsel %vm110, %v1447, 0
  %1451 = vmatprep.subr.bf16.mxu0 0
  %1452 = vmatpush1.bf16.msra.mxu0 0
  %1453 = vmatprep.subr.bf16.mxu0 0
  %1454 = vmatpush1.bf16.msra.mxu0 0
  %1455 = vmatprep.subr.bf16.mxu0 0
  %1456 = vmatpush1.bf16.msra.mxu0 0
  %1457 = vmatprep.subr.bf16.mxu0 0
  %1458 = vmatpush1.bf16.msra.mxu0 0
  %1459 = vmatprep.subr.bf16.mxu0 %v1020
  %1460 = vmatpush1.bf16.msra.mxu0 %v1019
  %1461 = vmatprep.subr.bf16.mxu0 %v1018
  %1462 = vmatpush1.bf16.msra.mxu0 %v1017
  %1463 = vmatprep.subr.bf16.mxu0 %v1016
  %1464 = vmatpush1.bf16.msra.mxu0 %v1015
  %1465 = vmatprep.subr.bf16.mxu0 %v1014
  %1466 = vmatpush1.bf16.msra.mxu0 %v1013
  %1467 = vmatprep.subr.bf16.mxu0 0
  %1468 = vmatpush2.bf16.msra.mxu0 0
  %1469 = vmatprep.subr.bf16.mxu0 0
  %1470 = vmatpush2.bf16.msra.mxu0 0
  %1471 = vmatprep.subr.bf16.mxu0 0
  %1472 = vmatpush2.bf16.msra.mxu0 0
  %1473 = vmatprep.subr.bf16.mxu0 0
  %1474 = vmatpush2.bf16.msra.mxu0 0
  %1475 = vmatprep.subr.bf16.mxu0 0
  %1476 = vmatpush2.bf16.msra.mxu0 0
  %1477 = vmatprep.subr.bf16.mxu0 0
  %1478 = vmatpush2.bf16.msra.mxu0 0
  %1479 = vmatprep.subr.bf16.mxu0 0
  %1480 = vmatpush2.bf16.msra.mxu0 0
  %1481 = vmatprep.subr.bf16.mxu0 0
  %1482 = vmatpush2.bf16.msra.mxu0 0
  %1483 = vmatprep.mubr.bf16.mxu0 0
  %1484 = vmatmul.mubr.bf16.gmra.mxu0 %v1449
  %v1485 = vpop.f32.mrf.mxu0
  %v1486 = vadd.f32 0.0, %v1485
  %v1487 = vpop.f32.mrf.mxu0
  %v1488 = vadd.f32 0.0, %v1487
  %v1489 = vpop.f32.mrf.mxu0
  %v1490 = vpop.f32.mrf.mxu0
  %1491 = vdwg.mxu0
  %v1492 = vadd.f32 %v1089, %v1486
  %v1493 = vadd.f32 %v1091, %v1488
  %v1494 = vxor.u32 %v1492, 2147483648
  %v1495 = vxor.u32 %v1493, 2147483648
  %v1496 = vmul.f32 %v1494, 1.442695
  %v1497 = vpow.pop %v1496
  %v1498 = vmul.f32 %v1495, 1.442695
  %v1499 = vpow.pop %v1498
  %v1500 = vadd.f32 %v1497, 1.0
  %v1501 = vadd.f32 %v1499, 1.0
  %v1502 = vrcp.pop %v1500
  %v1503 = vmul.f32 1.0, %v1502
  %v1504 = vrcp.pop %v1501
  %v1505 = vmul.f32 1.0, %v1504
  %v1506 = vtanh.pop %v1493
  %1508 = vrot.lane.b32.xlu0 %v1446, 64
  %v1509 = vpop.permute.xlu0 %1508
  %v1511 = vmul.f32 %v1503, %v1509
  %1513 = vrot.lane.b32.xlu0 %v1506, 64
  %v1514 = vpop.permute.xlu0 %1513
  %v1516 = vmul.f32 %v1503, %v1514
  %1518 = vrot.lane.b32.xlu0 %v1516, 64
  %v1519 = vpop.permute.xlu0 %1518
  %v1521 = vadd.f32 %v1511, %v1519
  %v1522 = vtanh.pop %v1521
  %1524 = vrot.lane.b32.xlu0 %v1522, 64
  %v1525 = vpop.permute.xlu0 %1524
  %v1527 = vmul.f32 %v1505, %v1525
  %v1528 = vsel %vm33, %v1527, %v1441
  %1530 = vrot.lane.b32.xlu0 %v1521, 64
  %v1531 = vpop.permute.xlu0 %1530
  %v1533 = vsel %vm33, %v1531, %v1446
  %v1534 = vpack.c.bf16 %v1528, %v1528
  %v1536 = vsel %vm110, %v1534, 0
  %1538 = vmatprep.subr.bf16.mxu0 0
  %1539 = vmatpush1.bf16.msra.mxu0 0
  %1540 = vmatprep.subr.bf16.mxu0 0
  %1541 = vmatpush1.bf16.msra.mxu0 0
  %1542 = vmatprep.subr.bf16.mxu0 0
  %1543 = vmatpush1.bf16.msra.mxu0 0
  %1544 = vmatprep.subr.bf16.mxu0 0
  %1545 = vmatpush1.bf16.msra.mxu0 0
  %1546 = vmatprep.subr.bf16.mxu0 %v1020
  %1547 = vmatpush1.bf16.msra.mxu0 %v1019
  %1548 = vmatprep.subr.bf16.mxu0 %v1018
  %1549 = vmatpush1.bf16.msra.mxu0 %v1017
  %1550 = vmatprep.subr.bf16.mxu0 %v1016
  %1551 = vmatpush1.bf16.msra.mxu0 %v1015
  %1552 = vmatprep.subr.bf16.mxu0 %v1014
  %1553 = vmatpush1.bf16.msra.mxu0 %v1013
  %1554 = vmatprep.subr.bf16.mxu0 0
  %1555 = vmatpush2.bf16.msra.mxu0 0
  %1556 = vmatprep.subr.bf16.mxu0 0
  %1557 = vmatpush2.bf16.msra.mxu0 0
  %1558 = vmatprep.subr.bf16.mxu0 0
  %1559 = vmatpush2.bf16.msra.mxu0 0
  %1560 = vmatprep.subr.bf16.mxu0 0
  %1561 = vmatpush2.bf16.msra.mxu0 0
  %1562 = vmatprep.subr.bf16.mxu0 0
  %1563 = vmatpush2.bf16.msra.mxu0 0
  %1564 = vmatprep.subr.bf16.mxu0 0
  %1565 = vmatpush2.bf16.msra.mxu0 0
  %1566 = vmatprep.subr.bf16.mxu0 0
  %1567 = vmatpush2.bf16.msra.mxu0 0
  %1568 = vmatprep.subr.bf16.mxu0 0
  %1569 = vmatpush2.bf16.msra.mxu0 0
  %1570 = vmatprep.mubr.bf16.mxu0 0
  %1571 = vmatmul.mubr.bf16.gmra.mxu0 %v1536
  %v1572 = vpop.f32.mrf.mxu0
  %v1573 = vadd.f32 0.0, %v1572
  %v1574 = vpop.f32.mrf.mxu0
  %v1575 = vadd.f32 0.0, %v1574
  %v1576 = vpop.f32.mrf.mxu0
  %v1577 = vpop.f32.mrf.mxu0
  %1578 = vdwg.mxu0
  %v1579 = vadd.f32 %v1093, %v1573
  %v1580 = vadd.f32 %v1095, %v1575
  %v1581 = vxor.u32 %v1579, 2147483648
  %v1582 = vxor.u32 %v1580, 2147483648
  %v1583 = vmul.f32 %v1581, 1.442695
  %v1584 = vpow.pop %v1583
  %v1585 = vmul.f32 %v1582, 1.442695
  %v1586 = vpow.pop %v1585
  %v1587 = vadd.f32 %v1584, 1.0
  %v1588 = vadd.f32 %v1586, 1.0
  %v1589 = vrcp.pop %v1587
  %v1590 = vmul.f32 1.0, %v1589
  %v1591 = vrcp.pop %v1588
  %v1592 = vmul.f32 1.0, %v1591
  %v1593 = vtanh.pop %v1580
  %1595 = vrot.lane.b32.xlu0 %v1533, 64
  %v1596 = vpop.permute.xlu0 %1595
  %v1598 = vmul.f32 %v1590, %v1596
  %1600 = vrot.lane.b32.xlu0 %v1593, 64
  %v1601 = vpop.permute.xlu0 %1600
  %v1603 = vmul.f32 %v1590, %v1601
  %1605 = vrot.lane.b32.xlu0 %v1603, 64
  %v1606 = vpop.permute.xlu0 %1605
  %v1608 = vadd.f32 %v1598, %v1606
  %v1609 = vtanh.pop %v1608
  %1611 = vrot.lane.b32.xlu0 %v1609, 64
  %v1612 = vpop.permute.xlu0 %1611
  %v1614 = vmul.f32 %v1592, %v1612
  %v1615 = vsel %vm34, %v1614, %v1528
  %1617 = vrot.lane.b32.xlu0 %v1608, 64
  %v1618 = vpop.permute.xlu0 %1617
  %v1620 = vsel %vm34, %v1618, %v1533
  %v1621 = vpack.c.bf16 %v1615, %v1615
  %v1623 = vsel %vm110, %v1621, 0
  %1625 = vmatprep.subr.bf16.mxu0 0
  %1626 = vmatpush1.bf16.msra.mxu0 0
  %1627 = vmatprep.subr.bf16.mxu0 0
  %1628 = vmatpush1.bf16.msra.mxu0 0
  %1629 = vmatprep.subr.bf16.mxu0 0
  %1630 = vmatpush1.bf16.msra.mxu0 0
  %1631 = vmatprep.subr.bf16.mxu0 0
  %1632 = vmatpush1.bf16.msra.mxu0 0
  %1633 = vmatprep.subr.bf16.mxu0 %v1020
  %1634 = vmatpush1.bf16.msra.mxu0 %v1019
  %1635 = vmatprep.subr.bf16.mxu0 %v1018
  %1636 = vmatpush1.bf16.msra.mxu0 %v1017
  %1637 = vmatprep.subr.bf16.mxu0 %v1016
  %1638 = vmatpush1.bf16.msra.mxu0 %v1015
  %1639 = vmatprep.subr.bf16.mxu0 %v1014
  %1640 = vmatpush1.bf16.msra.mxu0 %v1013
  %1641 = vmatprep.subr.bf16.mxu0 0
  %1642 = vmatpush2.bf16.msra.mxu0 0
  %1643 = vmatprep.subr.bf16.mxu0 0
  %1644 = vmatpush2.bf16.msra.mxu0 0
  %1645 = vmatprep.subr.bf16.mxu0 0
  %1646 = vmatpush2.bf16.msra.mxu0 0
  %1647 = vmatprep.subr.bf16.mxu0 0
  %1648 = vmatpush2.bf16.msra.mxu0 0
  %1649 = vmatprep.subr.bf16.mxu0 0
  %1650 = vmatpush2.bf16.msra.mxu0 0
  %1651 = vmatprep.subr.bf16.mxu0 0
  %1652 = vmatpush2.bf16.msra.mxu0 0
  %1653 = vmatprep.subr.bf16.mxu0 0
  %1654 = vmatpush2.bf16.msra.mxu0 0
  %1655 = vmatprep.subr.bf16.mxu0 0
  %1656 = vmatpush2.bf16.msra.mxu0 0
  %1657 = vmatprep.mubr.bf16.mxu0 0
  %1658 = vmatmul.mubr.bf16.gmra.mxu0 %v1623
  %v1659 = vpop.f32.mrf.mxu0
  %v1660 = vadd.f32 0.0, %v1659
  %v1661 = vpop.f32.mrf.mxu0
  %v1662 = vadd.f32 0.0, %v1661
  %v1663 = vpop.f32.mrf.mxu0
  %v1664 = vpop.f32.mrf.mxu0
  %1665 = vdwg.mxu0
  %v1666 = vadd.f32 %v1099, %v1660
  %v1667 = vadd.f32 %v1101, %v1662
  %v1668 = vxor.u32 %v1666, 2147483648
  %v1669 = vxor.u32 %v1667, 2147483648
  %v1670 = vmul.f32 %v1668, 1.442695
  %v1671 = vpow.pop %v1670
  %v1672 = vmul.f32 %v1669, 1.442695
  %v1673 = vpow.pop %v1672
  %v1674 = vadd.f32 %v1671, 1.0
  %v1675 = vadd.f32 %v1673, 1.0
  %v1676 = vrcp.pop %v1674
  %v1677 = vmul.f32 1.0, %v1676
  %v1678 = vrcp.pop %v1675
  %v1679 = vmul.f32 1.0, %v1678
  %v1680 = vtanh.pop %v1667
  %1682 = vrot.lane.b32.xlu0 %v1620, 64
  %v1683 = vpop.permute.xlu0 %1682
  %v1685 = vmul.f32 %v1677, %v1683
  %1687 = vrot.lane.b32.xlu0 %v1680, 64
  %v1688 = vpop.permute.xlu0 %1687
  %v1690 = vmul.f32 %v1677, %v1688
  %1692 = vrot.lane.b32.xlu0 %v1690, 64
  %v1693 = vpop.permute.xlu0 %1692
  %v1695 = vadd.f32 %v1685, %v1693
  %v1696 = vtanh.pop %v1695
  %1698 = vrot.lane.b32.xlu0 %v1696, 64
  %v1699 = vpop.permute.xlu0 %1698
  %v1701 = vmul.f32 %v1679, %v1699
  %v1702 = vsel %vm35, %v1701, %v1615
  %1704 = vrot.lane.b32.xlu0 %v1695, 64
  %v1705 = vpop.permute.xlu0 %1704
  %v1707 = vsel %vm35, %v1705, %v1620
  %v1708 = vpack.c.bf16 %v1702, %v1702
  %v1710 = vsel %vm110, %v1708, 0
  %1712 = vmatprep.subr.bf16.mxu0 0
  %1713 = vmatpush1.bf16.msra.mxu0 0
  %1714 = vmatprep.subr.bf16.mxu0 0
  %1715 = vmatpush1.bf16.msra.mxu0 0
  %1716 = vmatprep.subr.bf16.mxu0 0
  %1717 = vmatpush1.bf16.msra.mxu0 0
  %1718 = vmatprep.subr.bf16.mxu0 0
  %1719 = vmatpush1.bf16.msra.mxu0 0
  %1720 = vmatprep.subr.bf16.mxu0 %v1020
  %1721 = vmatpush1.bf16.msra.mxu0 %v1019
  %1722 = vmatprep.subr.bf16.mxu0 %v1018
  %1723 = vmatpush1.bf16.msra.mxu0 %v1017
  %1724 = vmatprep.subr.bf16.mxu0 %v1016
  %1725 = vmatpush1.bf16.msra.mxu0 %v1015
  %1726 = vmatprep.subr.bf16.mxu0 %v1014
  %1727 = vmatpush1.bf16.msra.mxu0 %v1013
  %1728 = vmatprep.subr.bf16.mxu0 0
  %1729 = vmatpush2.bf16.msra.mxu0 0
  %1730 = vmatprep.subr.bf16.mxu0 0
  %1731 = vmatpush2.bf16.msra.mxu0 0
  %1732 = vmatprep.subr.bf16.mxu0 0
  %1733 = vmatpush2.bf16.msra.mxu0 0
  %1734 = vmatprep.subr.bf16.mxu0 0
  %1735 = vmatpush2.bf16.msra.mxu0 0
  %1736 = vmatprep.subr.bf16.mxu0 0
  %1737 = vmatpush2.bf16.msra.mxu0 0
  %1738 = vmatprep.subr.bf16.mxu0 0
  %1739 = vmatpush2.bf16.msra.mxu0 0
  %1740 = vmatprep.subr.bf16.mxu0 0
  %1741 = vmatpush2.bf16.msra.mxu0 0
  %1742 = vmatprep.subr.bf16.mxu0 0
  %1743 = vmatpush2.bf16.msra.mxu0 0
  %1744 = vmatprep.mubr.bf16.mxu0 0
  %1745 = vmatmul.mubr.bf16.gmra.mxu0 %v1710
  %v1746 = vpop.f32.mrf.mxu0
  %v1747 = vadd.f32 0.0, %v1746
  %v1748 = vpop.f32.mrf.mxu0
  %v1749 = vadd.f32 0.0, %v1748
  %v1750 = vpop.f32.mrf.mxu0
  %v1751 = vpop.f32.mrf.mxu0
  %1752 = vdwg.mxu0
  %v1753 = vadd.f32 %v1103, %v1747
  %v1754 = vadd.f32 %v1105, %v1749
  %v1755 = vxor.u32 %v1753, 2147483648
  %v1756 = vxor.u32 %v1754, 2147483648
  %v1757 = vmul.f32 %v1755, 1.442695
  %v1758 = vpow.pop %v1757
  %v1759 = vmul.f32 %v1756, 1.442695
  %v1760 = vpow.pop %v1759
  %v1761 = vadd.f32 %v1758, 1.0
  %v1762 = vadd.f32 %v1760, 1.0
  %v1763 = vrcp.pop %v1761
  %v1764 = vmul.f32 1.0, %v1763
  %v1765 = vrcp.pop %v1762
  %v1766 = vmul.f32 1.0, %v1765
  %v1767 = vtanh.pop %v1754
  %1769 = vrot.lane.b32.xlu0 %v1707, 64
  %v1770 = vpop.permute.xlu0 %1769
  %v1772 = vmul.f32 %v1764, %v1770
  %1774 = vrot.lane.b32.xlu0 %v1767, 64
  %v1775 = vpop.permute.xlu0 %1774
  %v1777 = vmul.f32 %v1764, %v1775
  %1779 = vrot.lane.b32.xlu0 %v1777, 64
  %v1780 = vpop.permute.xlu0 %1779
  %v1782 = vadd.f32 %v1772, %v1780
  %v1783 = vtanh.pop %v1782
  %1785 = vrot.lane.b32.xlu0 %v1783, 64
  %v1786 = vpop.permute.xlu0 %1785
  %v1788 = vmul.f32 %v1766, %v1786
  %v1789 = vsel %vm36, %v1788, %v1702
  %v1790 = vld [vmem:[%s4] sm:$0xff]
  %v1791 = vld [vmem:[%s4 + $0x8] sm:$0xff]
  %v1792 = vld [vmem:[%s4 + $0x10] sm:$0xff]
  %v1793 = vld [vmem:[%s4 + $0x18] sm:$0xff]
  %v1794 = vld [vmem:[%s4 + $0x20] sm:$0xff]
  %v1795 = vld [vmem:[%s4 + $0x28] sm:$0xff]
  %v1796 = vld [vmem:[%s4 + $0x30] sm:$0xff]
  %v1797 = vld [vmem:[%s4 + $0x38] sm:$0xff]
  %v1798 = vld [vmem:[%s4 + $0x40] sm:$0x1]
  %v1799 = vlaneseq
  %v1800 = vshrl.u32 %v1799, 7
  %v1801 = vsub.s32 0, %v1800
  %v1802 = vrot.slane %v1798, %v1801
  %v1804 = vsel %vm110, %v1789, 0
  %1806 = vmatprep.subr.mxu0 0.0
  %1807 = vmatpush1.msra.mxu0 0.0
  %1808 = vmatprep.subr.mxu0 0.0
  %1809 = vmatpush1.msra.mxu0 0.0
  %1810 = vmatprep.subr.mxu0 0.0
  %1811 = vmatpush1.msra.mxu0 0.0
  %1812 = vmatprep.subr.mxu0 0.0
  %1813 = vmatpush1.msra.mxu0 0.0
  %1814 = vmatprep.subr.mxu0 0.0
  %1815 = vmatpush1.msra.mxu0 0.0
  %1816 = vmatprep.subr.mxu0 0.0
  %1817 = vmatpush1.msra.mxu0 0.0
  %1818 = vmatprep.subr.mxu0 0.0
  %1819 = vmatpush1.msra.mxu0 0.0
  %1820 = vmatprep.subr.mxu0 0.0
  %1821 = vmatpush1.msra.mxu0 0.0
  %1822 = vmatprep.subr.mxu0 0.0
  %1823 = vmatpush1.msra.mxu0 %v1797
  %1824 = vmatprep.subr.mxu0 0.0
  %1825 = vmatpush1.msra.mxu0 %v1796
  %1826 = vmatprep.subr.mxu0 0.0
  %1827 = vmatpush1.msra.mxu0 %v1795
  %1828 = vmatprep.subr.mxu0 0.0
  %1829 = vmatpush1.msra.mxu0 %v1794
  %1830 = vmatprep.subr.mxu0 0.0
  %1831 = vmatpush1.msra.mxu0 %v1793
  %1832 = vmatprep.subr.mxu0 0.0
  %1833 = vmatpush1.msra.mxu0 %v1792
  %1834 = vmatprep.subr.mxu0 0.0
  %1835 = vmatpush1.msra.mxu0 %v1791
  %1836 = vmatprep.subr.mxu0 0.0
  %1837 = vmatpush1.msra.mxu0 %v1790
  %1838 = vmatprep.subr.mxu0 0.0
  %1839 = vmatpush2.msra.mxu0 0.0
  %1840 = vmatprep.subr.mxu0 0.0
  %1841 = vmatpush2.msra.mxu0 0.0
  %1842 = vmatprep.subr.mxu0 0.0
  %1843 = vmatpush2.msra.mxu0 0.0
  %1844 = vmatprep.subr.mxu0 0.0
  %1845 = vmatpush2.msra.mxu0 0.0
  %1846 = vmatprep.subr.mxu0 0.0
  %1847 = vmatpush2.msra.mxu0 0.0
  %1848 = vmatprep.subr.mxu0 0.0
  %1849 = vmatpush2.msra.mxu0 0.0
  %1850 = vmatprep.subr.mxu0 0.0
  %1851 = vmatpush2.msra.mxu0 0.0
  %1852 = vmatprep.subr.mxu0 0.0
  %1853 = vmatpush2.msra.mxu0 0.0
  %1854 = vmatprep.subr.mxu0 0.0
  %1855 = vmatpush2.msra.mxu0 0.0
  %1856 = vmatprep.subr.mxu0 0.0
  %1857 = vmatpush2.msra.mxu0 0.0
  %1858 = vmatprep.subr.mxu0 0.0
  %1859 = vmatpush2.msra.mxu0 0.0
  %1860 = vmatprep.subr.mxu0 0.0
  %1861 = vmatpush2.msra.mxu0 0.0
  %1862 = vmatprep.subr.mxu0 0.0
  %1863 = vmatpush2.msra.mxu0 0.0
  %1864 = vmatprep.subr.mxu0 0.0
  %1865 = vmatpush2.msra.mxu0 0.0
  %1866 = vmatprep.subr.mxu0 0.0
  %1867 = vmatpush2.msra.mxu0 0.0
  %1868 = vmatprep.subr.mxu0 0.0
  %1869 = vmatpush2.msra.mxu0 0.0
  %1870 = vmatprep.mubr.f32.mxu0 0.0
  %1871 = vmatmul.mubr.f32.gmra.mxu0 %v1804
  %v1872 = vpop.f32.mrf.mxu0
  %v1873 = vadd.f32 %v1802, %v1872
  %v1874 = vpop.f32.mrf.mxu0
  %1875 = vdwg.mxu0
  %1876 = vst [vmem:[%s5] sm:$0xff] %v1873
  // Predicated region
  $region22: #{rnn_forward.1} parent=0 // pred_check
    _
  $region23: #{rnn_forward.1} parent=0 // pred_check_branch
    %1878 = sbr.rel (0) target = $region25
  $region24: #{rnn_forward.1} parent=0 // pred_region
    _
  $region25: #{rnn_forward.1} parent=0 // pred_fallthru
    _
  // Predicated region
  $region26: #{rnn_forward.1} parent=0 // pred_check
    _
  $region27: #{rnn_forward.1} parent=0 // pred_check_branch
    %1880 = sbr.rel (0) target = $region29
  $region28: #{rnn_forward.1} parent=0 // pred_region
    _
  $region29: #{rnn_forward.1} parent=0 // pred_fallthru
    _

</llo_original>
